<compile_context>
chip_gen: v7x
topology: tpu7x:2x2x1
jax: 0.10.0
libtpu: 0.0.40
codegen_flags: <defaults>
</compile_context>

<pallas_src>
import jax
import jax.numpy as jnp
from jax.experimental import pallas as pl
from jax.experimental.pallas import tpu as pltpu


def _round_up(x, m):
    return (x + m - 1) // m * m


# ---------------------------------------------------------------------------
# Kernel: fused (im2col-matmul) conv3x3 + folded BatchNorm + ReLU
# ---------------------------------------------------------------------------
def _conv3x3_bn_relu_kernel(xcol_ref, w_ref, s_ref, b_ref, o_ref):
    # xcol_ref: (1, THW, 9*Cin) bf16   w_ref: (9*Cin, Cout) bf16
    # s_ref/b_ref: (1, Cout) f32       o_ref: (1, THW, Cout)
    acc = jnp.dot(xcol_ref[0], w_ref[...],
                  preferred_element_type=jnp.float32)     # single MXU matmul
    y = acc * s_ref[...] + b_ref[...]                     # folded BN (f32)
    o_ref[0] = jnp.maximum(y, 0.0).astype(o_ref.dtype)    # ReLU


# ---------------------------------------------------------------------------
# Wrapper: padding + im2col concat (layout plumbing) + tiled pallas_call
# ---------------------------------------------------------------------------
def conv3x3_bn_relu(x, w, scale, bias, *, out_dtype=jnp.bfloat16, tile_hw=512):
    """x: (N,H,W,Cin) ; w: (Cout,Cin,3,3) [OIHW] ; scale/bias: (Cout,)."""
    N, H, W, Cin = x.shape
    Cout = w.shape[0]
    HW = H * W
    K = 9 * Cin

    # im2col: concat the 9 shifted taps on the channel dim -> (N, HW, 9*Cin).
    xp = jnp.pad(x.astype(jnp.bfloat16), ((0, 0), (1, 1), (1, 1), (0, 0)))
    cols = [xp[:, kh:kh + H, kw:kw + W, :]
            for kh in range(3) for kw in range(3)]
    xcol = jnp.concatenate(cols, axis=-1).reshape(N, HW, K)

    # Weight reshaped to match the (kh, kw, ci) flattening above.
    wk = jnp.transpose(w, (2, 3, 1, 0)).reshape(K, Cout).astype(jnp.bfloat16)

    # HW tiling (pipelined grid); tile rows are a multiple of 16 (bf16 sublane).
    thw = min(tile_hw, _round_up(HW, 16))
    hw_pad = _round_up(HW, thw)
    if hw_pad != HW:
        xcol = jnp.pad(xcol, ((0, 0), (0, hw_pad - HW), (0, 0)))

    out = pl.pallas_call(
        _conv3x3_bn_relu_kernel,
        out_shape=jax.ShapeDtypeStruct((N, hw_pad, Cout), out_dtype),
        grid=(N, hw_pad // thw),
        in_specs=[
            pl.BlockSpec((1, thw, K), lambda n, t: (n, t, 0)),
            pl.BlockSpec((K, Cout), lambda n, t: (0, 0)),
            pl.BlockSpec((1, Cout), lambda n, t: (0, 0)),
            pl.BlockSpec((1, Cout), lambda n, t: (0, 0)),
        ],
        out_specs=pl.BlockSpec((1, thw, Cout), lambda n, t: (n, t, 0)),
        compiler_params=pltpu.CompilerParams(
            dimension_semantics=("parallel", "parallel")),
    )(xcol, wk,
      scale.reshape(1, Cout).astype(jnp.float32),
      bias.reshape(1, Cout).astype(jnp.float32))

    return out[:, :HW].reshape(N, H, W, Cout)


# ---------------------------------------------------------------------------
# DoubleConvEncoder forward
# ---------------------------------------------------------------------------
def double_conv_encoder_forward(params, x_nchw):
    (w1, s1, b1), (w2, s2, b2) = params
    x = jnp.transpose(x_nchw, (0, 2, 3, 1))                 # NCHW -> NHWC
    x = conv3x3_bn_relu(x, w1, s1, b1, out_dtype=jnp.bfloat16)
    x = conv3x3_bn_relu(x, w2, s2, b2, out_dtype=jnp.float32)
    return jnp.transpose(x, (0, 3, 1, 2))                   # NHWC -> NCHW


# ---------------------------------------------------------------------------
# Parameters (PyTorch-shaped, BN folded to scale/bias in eval mode)
# ---------------------------------------------------------------------------
def _init_conv_bn(key, cin, cout):
    k1, k2, k3 = jax.random.split(key, 3)
    w = 0.1 * jax.random.normal(k1, (cout, cin, 3, 3), jnp.float32)   # OIHW
    gamma = 1.0 + 0.1 * jax.random.normal(k2, (cout,), jnp.float32)
    beta = 0.1 * jax.random.normal(k3, (cout,), jnp.float32)
    running_mean = jnp.zeros((cout,), jnp.float32)
    running_var = jnp.ones((cout,), jnp.float32)
    eps = 1e-5
    scale = gamma / jnp.sqrt(running_var + eps)
    bias = beta - running_mean * scale
    return (w, scale, bias)


def init_double_conv_encoder_params(key, in_channels, out_channels):
    k1, k2 = jax.random.split(key)
    return (_init_conv_bn(k1, in_channels, out_channels),
            _init_conv_bn(k2, out_channels, out_channels))


# ---------------------------------------------------------------------------
# Pure-JAX reference (f32) for a correctness sanity check
# ---------------------------------------------------------------------------
def _reference_forward(params, x_nchw):
    x = jnp.transpose(x_nchw, (0, 2, 3, 1)).astype(jnp.float32)
    for (w, s, b) in params:
        w_hwio = jnp.transpose(w, (2, 3, 1, 0))              # OIHW -> HWIO
        y = jax.lax.conv_general_dilated(
            x, w_hwio, window_strides=(1, 1), padding="SAME",
            dimension_numbers=("NHWC", "HWIO", "NHWC"))
        x = jnp.maximum(y * s + b, 0.0)
    return jnp.transpose(x, (0, 3, 1, 2))


if __name__ == "__main__":
    key = jax.random.PRNGKey(0)
    pkey, xkey = jax.random.split(key)
    IN_CH, OUT_CH = 4, 32
    params = init_double_conv_encoder_params(pkey, IN_CH, OUT_CH)
    x = jax.random.normal(xkey, (2, IN_CH, 16, 16), jnp.float32)

    out = jax.jit(double_conv_encoder_forward)(params, x)
    out = jax.block_until_ready(out)

    assert out.shape == (2, OUT_CH, 16, 16), out.shape
    assert bool(jnp.all(jnp.isfinite(out)))

    # bf16-tolerant check against the f32 reference.
    ref = _reference_forward(params, x)
    max_err = float(jnp.max(jnp.abs(out - ref)))
    tol = 0.1 * (1.0 + float(jnp.max(jnp.abs(ref))))
    assert max_err < tol, (max_err, tol)

    print("KERNEL_OK")
</pallas_src>

<mosaic_0001>
module attributes {stable_mosaic.version = 11 : i64} {
  func.func @_conv3x3_bn_relu_kernel(%arg0: i32, %arg1: i32, %arg2: memref<1x256x36xbf16, #tpu.memory_space<vmem>>, %arg3: memref<36x32xbf16, #tpu.memory_space<vmem>>, %arg4: memref<1x32xf32, #tpu.memory_space<vmem>>, %arg5: memref<1x32xf32, #tpu.memory_space<vmem>>, %arg6: memref<1x256x32xbf16, #tpu.memory_space<vmem>>) attributes {dimension_semantics = [#tpu.dimension_semantics<parallel>, #tpu.dimension_semantics<parallel>], iteration_bounds = array<i64: 2, 1>, scalar_prefetch = 0 : i64, scratch_operands = 0 : i64, tpu.core_type = #tpu.core_type<tc>, window_params = [{transform_indices = @transform_0, window_bounds = array<i64: 1, 256, 36>}, {pipeline_mode = #tpu.pipeline_mode<synchronous>, transform_indices = @transform_1, window_bounds = array<i64: 36, 32>}, {pipeline_mode = #tpu.pipeline_mode<synchronous>, transform_indices = @transform_2, window_bounds = array<i64: 1, 32>}, {pipeline_mode = #tpu.pipeline_mode<synchronous>, transform_indices = @transform_3, window_bounds = array<i64: 1, 32>}, {transform_indices = @transform_4, window_bounds = array<i64: 1, 256, 32>}]} {
    %c0 = arith.constant 0 : index
    %c0_0 = arith.constant 0 : index
    %c0_1 = arith.constant 0 : index
    %0 = vector.load %arg2[%c0, %c0_0, %c0_1] : memref<1x256x36xbf16, #tpu.memory_space<vmem>>, vector<1x256x36xbf16>
    %1 = vector.shape_cast %0 : vector<1x256x36xbf16> to vector<256x36xbf16>
    %c0_2 = arith.constant 0 : index
    %c0_3 = arith.constant 0 : index
    %2 = vector.load %arg3[%c0_2, %c0_3] : memref<36x32xbf16, #tpu.memory_space<vmem>>, vector<36x32xbf16>
    %cst = arith.constant dense<0.000000e+00> : vector<256x32xf32>
    %3 = tpu.matmul %1, %2, %cst {dimension_numbers = #tpu.dot_dimension_numbers<[1], [0], [0], [1], [0, 0, 1, 1], [], []>} : vector<256x36xbf16>, vector<36x32xbf16>, vector<256x32xf32> -> vector<256x32xf32>
    %c0_4 = arith.constant 0 : index
    %c0_5 = arith.constant 0 : index
    %4 = vector.load %arg4[%c0_4, %c0_5] : memref<1x32xf32, #tpu.memory_space<vmem>>, vector<1x32xf32>
    %5 = vector.broadcast %4 : vector<1x32xf32> to vector<256x32xf32>
    %6 = arith.mulf %3, %5 : vector<256x32xf32>
    %c0_6 = arith.constant 0 : index
    %c0_7 = arith.constant 0 : index
    %7 = vector.load %arg5[%c0_6, %c0_7] : memref<1x32xf32, #tpu.memory_space<vmem>>, vector<1x32xf32>
    %8 = vector.broadcast %7 : vector<1x32xf32> to vector<256x32xf32>
    %9 = arith.addf %6, %8 : vector<256x32xf32>
    %cst_8 = arith.constant 0.000000e+00 : f32
    %10 = vector.broadcast %cst_8 : f32 to vector<256x32xf32>
    %11 = arith.maximumf %9, %10 : vector<256x32xf32>
    %12 = arith.truncf %11 : vector<256x32xf32> to vector<256x32xbf16>
    %c0_9 = arith.constant 0 : index
    %c0_10 = arith.constant 0 : index
    %c0_11 = arith.constant 0 : index
    %13 = vector.load %arg6[%c0_9, %c0_10, %c0_11] : memref<1x256x32xbf16, #tpu.memory_space<vmem>>, vector<1x256x32xbf16>
    %14 = vector.shape_cast %13 : vector<1x256x32xbf16> to vector<256x32xbf16>
    %15 = vector.shape_cast %12 : vector<256x32xbf16> to vector<1x256x32xbf16>
    tpu.vector_store %arg6[%c0_9, %c0_10, %c0_11], %15 {strides = array<i32>} : memref<1x256x32xbf16, #tpu.memory_space<vmem>>, vector<1x256x32xbf16>,
    return
  }
  func.func @transform_0(%arg0: i32, %arg1: i32) -> (i32, i32, i32) {
    %c0_i32 = arith.constant 0 : i32
    %c0_i32_0 = arith.constant 0 : i32
    return %arg0, %arg1, %c0_i32 : i32, i32, i32
  }
  func.func @transform_1(%arg0: i32, %arg1: i32) -> (i32, i32) {
    %c0_i32 = arith.constant 0 : i32
    %c0_i32_0 = arith.constant 0 : i32
    %c0_i32_1 = arith.constant 0 : i32
    return %c0_i32, %c0_i32_0 : i32, i32
  }
  func.func @transform_2(%arg0: i32, %arg1: i32) -> (i32, i32) {
    %c0_i32 = arith.constant 0 : i32
    %c0_i32_0 = arith.constant 0 : i32
    %c0_i32_1 = arith.constant 0 : i32
    return %c0_i32, %c0_i32_0 : i32, i32
  }
  func.func @transform_3(%arg0: i32, %arg1: i32) -> (i32, i32) {
    %c0_i32 = arith.constant 0 : i32
    %c0_i32_0 = arith.constant 0 : i32
    %c0_i32_1 = arith.constant 0 : i32
    return %c0_i32, %c0_i32_0 : i32, i32
  }
  func.func @transform_4(%arg0: i32, %arg1: i32) -> (i32, i32, i32) {
    %c0_i32 = arith.constant 0 : i32
    %c0_i32_0 = arith.constant 0 : i32
    return %arg0, %arg1, %c0_i32 : i32, i32, i32
  }
}

module attributes {stable_mosaic.version = 11 : i64} {
  func.func @_conv3x3_bn_relu_kernel(%arg0: i32, %arg1: i32, %arg2: memref<1x256x288xbf16, #tpu.memory_space<vmem>>, %arg3: memref<288x32xbf16, #tpu.memory_space<vmem>>, %arg4: memref<1x32xf32, #tpu.memory_space<vmem>>, %arg5: memref<1x32xf32, #tpu.memory_space<vmem>>, %arg6: memref<1x256x32xf32, #tpu.memory_space<vmem>>) attributes {dimension_semantics = [#tpu.dimension_semantics<parallel>, #tpu.dimension_semantics<parallel>], iteration_bounds = array<i64: 2, 1>, scalar_prefetch = 0 : i64, scratch_operands = 0 : i64, tpu.core_type = #tpu.core_type<tc>, window_params = [{transform_indices = @transform_0, window_bounds = array<i64: 1, 256, 288>}, {pipeline_mode = #tpu.pipeline_mode<synchronous>, transform_indices = @transform_1, window_bounds = array<i64: 288, 32>}, {pipeline_mode = #tpu.pipeline_mode<synchronous>, transform_indices = @transform_2, window_bounds = array<i64: 1, 32>}, {pipeline_mode = #tpu.pipeline_mode<synchronous>, transform_indices = @transform_3, window_bounds = array<i64: 1, 32>}, {transform_indices = @transform_4, window_bounds = array<i64: 1, 256, 32>}]} {
    %c0 = arith.constant 0 : index
    %c0_0 = arith.constant 0 : index
    %c0_1 = arith.constant 0 : index
    %0 = vector.load %arg2[%c0, %c0_0, %c0_1] : memref<1x256x288xbf16, #tpu.memory_space<vmem>>, vector<1x256x288xbf16>
    %1 = vector.shape_cast %0 : vector<1x256x288xbf16> to vector<256x288xbf16>
    %c0_2 = arith.constant 0 : index
    %c0_3 = arith.constant 0 : index
    %2 = vector.load %arg3[%c0_2, %c0_3] : memref<288x32xbf16, #tpu.memory_space<vmem>>, vector<288x32xbf16>
    %cst = arith.constant dense<0.000000e+00> : vector<256x32xf32>
    %3 = tpu.matmul %1, %2, %cst {dimension_numbers = #tpu.dot_dimension_numbers<[1], [0], [0], [1], [0, 0, 1, 1], [], []>} : vector<256x288xbf16>, vector<288x32xbf16>, vector<256x32xf32> -> vector<256x32xf32>
    %c0_4 = arith.constant 0 : index
    %c0_5 = arith.constant 0 : index
    %4 = vector.load %arg4[%c0_4, %c0_5] : memref<1x32xf32, #tpu.memory_space<vmem>>, vector<1x32xf32>
    %5 = vector.broadcast %4 : vector<1x32xf32> to vector<256x32xf32>
    %6 = arith.mulf %3, %5 : vector<256x32xf32>
    %c0_6 = arith.constant 0 : index
    %c0_7 = arith.constant 0 : index
    %7 = vector.load %arg5[%c0_6, %c0_7] : memref<1x32xf32, #tpu.memory_space<vmem>>, vector<1x32xf32>
    %8 = vector.broadcast %7 : vector<1x32xf32> to vector<256x32xf32>
    %9 = arith.addf %6, %8 : vector<256x32xf32>
    %cst_8 = arith.constant 0.000000e+00 : f32
    %10 = vector.broadcast %cst_8 : f32 to vector<256x32xf32>
    %11 = arith.maximumf %9, %10 : vector<256x32xf32>
    %c0_9 = arith.constant 0 : index
    %c0_10 = arith.constant 0 : index
    %c0_11 = arith.constant 0 : index
    %12 = vector.load %arg6[%c0_9, %c0_10, %c0_11] : memref<1x256x32xf32, #tpu.memory_space<vmem>>, vector<1x256x32xf32>
    %13 = vector.shape_cast %12 : vector<1x256x32xf32> to vector<256x32xf32>
    %14 = vector.shape_cast %11 : vector<256x32xf32> to vector<1x256x32xf32>
    tpu.vector_store %arg6[%c0_9, %c0_10, %c0_11], %14 {strides = array<i32>} : memref<1x256x32xf32, #tpu.memory_space<vmem>>, vector<1x256x32xf32>,
    return
  }
  func.func @transform_0(%arg0: i32, %arg1: i32) -> (i32, i32, i32) {
    %c0_i32 = arith.constant 0 : i32
    %c0_i32_0 = arith.constant 0 : i32
    return %arg0, %arg1, %c0_i32 : i32, i32, i32
  }
  func.func @transform_1(%arg0: i32, %arg1: i32) -> (i32, i32) {
    %c0_i32 = arith.constant 0 : i32
    %c0_i32_0 = arith.constant 0 : i32
    %c0_i32_1 = arith.constant 0 : i32
    return %c0_i32, %c0_i32_0 : i32, i32
  }
  func.func @transform_2(%arg0: i32, %arg1: i32) -> (i32, i32) {
    %c0_i32 = arith.constant 0 : i32
    %c0_i32_0 = arith.constant 0 : i32
    %c0_i32_1 = arith.constant 0 : i32
    return %c0_i32, %c0_i32_0 : i32, i32
  }
  func.func @transform_3(%arg0: i32, %arg1: i32) -> (i32, i32) {
    %c0_i32 = arith.constant 0 : i32
    %c0_i32_0 = arith.constant 0 : i32
    %c0_i32_1 = arith.constant 0 : i32
    return %c0_i32, %c0_i32_0 : i32, i32
  }
  func.func @transform_4(%arg0: i32, %arg1: i32) -> (i32, i32, i32) {
    %c0_i32 = arith.constant 0 : i32
    %c0_i32_0 = arith.constant 0 : i32
    return %arg0, %arg1, %c0_i32 : i32, i32, i32
  }
}

</mosaic_0001>

<llo_original>
// kernel: double_conv_encoder_forward.2
$region0: #{double_conv_encoder_forward.2}
  #allocation0 [shape = 'u32[]', space=smem, size = 0x4, offset = 0x4, fixed_abs, tag = 'smem constant byte address 0x4 - core index']
  #allocation1 [shape = 'u32[144,128]{1,0:T(1,128)}', space=vmem, size = 0x12000, scoped, tag = 'internal scratch']
  %s0 = inlined_call_operand.vmem [shape: bf16[2,256,36], index: 0, kind: input, shape index: {}]
  %s1 = inlined_call_operand.vmem [shape: bf16[36,32], index: 1, kind: input, shape index: {}]
  %s2 = inlined_call_operand.vmem [shape: f32[1,32], index: 2, kind: input, shape index: {}]
  %s3 = inlined_call_operand.vmem [shape: f32[1,32], index: 3, kind: input, shape index: {}]
  %s4 = inlined_call_operand.vmem [shape: bf16[2,256,32], index: 4, kind: output, shape index: {}]
  %s5 = sld [smem:[#allocation0]]
  $region49: #{double_conv_encoder_forward.2} parent=0
    _
  %s7 = ssub.s32 1, %s5
  %s8 = scalar_select 0, %s7, %s5
  loop: start=0, step=1, limit=4
  $region2: #{double_conv_encoder_forward.2} parent=0 // loop_pre_header
    _
  $region3: #{double_conv_encoder_forward.2} parent=0 // loop_header
    %s10 = sphi 0, %s14
    %p11 = scmp.ge.s32.totalorder %s10, 4
    %s17 = sphi 0, %s29
    %s18 = sphi 0, %s25
    %s19 = sphi 0, %s17
    %s20 = sphi 0, %s18
    %s21 = sphi 0, %s19
    %s22 = sphi 0, %s20
    %s34 = sphi 0, %s36
    %s37 = sphi 0, %s34
    %s38 = sphi 0, %s37
    %s54 = sphi 0, %s38
    %s58 = sphi 0, %s58
    %s60 = sphi 0, %s58
    %s61 = sphi 0, %s60
    %s75 = sphi 0, %s61
    %s79 = sphi 0, %s79
    %s81 = sphi 0, %s79
    %s82 = sphi 0, %s81
    %s96 = sphi 0, %s82
    %s100 = sphi 0, %s100
    %s102 = sphi 0, %s100
    %s103 = sphi 0, %s102
    %s117 = sphi 0, %s103
    %s125 = sphi 0, %s127
    %s128 = sphi 0, %s125
    %s129 = sphi 0, %s128
    %s145 = sphi 0, %s129
  $region4: #{double_conv_encoder_forward.2} parent=0 // loop_header_branch
    %13 = sbr.rel (%p11) target = $region8
  $region5: #{double_conv_encoder_forward.2} parent=0 // loop_body
    %s15 = ssub.s32 %s10, 1
    %s16 = ssub.s32 %s10, 2
    %s23 = sadd.s32 1, %s18
    %p24 = scmp.ge.s32.totalorder %s23, 1
    %s25 = scalar_select %p24, 0, %s23
    %s26 = sadd.s32 1, %s17
    %s27 = scalar_select %p24, %s26, %s17
    %p28 = scmp.ge.s32.totalorder %s27, 2
    %s29 = scalar_select %p28, 0, %s27
    %s30 = ssub.s32 %s17, %s29
    %s31 = ssub.s32 %s18, %s25
    %s32 = sor.u32 %s30, %s31
    %p33 = scmp.eq.s32.totalorder %s32, 0
    %s35 = sadd.s32 %s34, 1
    %s36 = scalar_select %p33, %s34, %s35
    %p39 = pneg %p33
    %p40 = scmp.eq.s32.totalorder %s10, 1
    %p41 = por %p39, %p40
    %p42 = scmp.ne.s32.totalorder %s34, %s37
    %p43 = scmp.eq.s32.totalorder %s10, 0
    %p44 = por %p42, %p43
    %p45 = scmp.ne.s32.totalorder %s34, %s37
    %p46 = scmp.eq.s32.totalorder %s15, 1
    %p47 = por %p45, %p46
    %p48 = scmp.ne.s32.totalorder %s37, %s38
    %p49 = scmp.eq.s32.totalorder %s15, 0
    %p50 = por %p48, %p49
    %p51 = scmp.ne.s32.totalorder %s37, %s38
    %p52 = scmp.eq.s32.totalorder %s16, 1
    %p53 = por %p51, %p52
    %p55 = scmp.ne.s32.totalorder %s38, %s54
    %p56 = scmp.eq.s32.totalorder %s16, 0
    %p57 = por %p55, %p56
    %s59 = sadd.s32 %s58, 1
    %p62 = scmp.eq.s32.totalorder %s10, 1
    %p63 = scmp.ne.s32.totalorder %s58, %s60
    %p64 = scmp.eq.s32.totalorder %s10, 0
    %p65 = por %p63, %p64
    %p66 = scmp.ne.s32.totalorder %s58, %s60
    %p67 = scmp.eq.s32.totalorder %s15, 1
    %p68 = por %p66, %p67
    %p69 = scmp.ne.s32.totalorder %s60, %s61
    %p70 = scmp.eq.s32.totalorder %s15, 0
    %p71 = por %p69, %p70
    %p72 = scmp.ne.s32.totalorder %s60, %s61
    %p73 = scmp.eq.s32.totalorder %s16, 1
    %p74 = por %p72, %p73
    %p76 = scmp.ne.s32.totalorder %s61, %s75
    %p77 = scmp.eq.s32.totalorder %s16, 0
    %p78 = por %p76, %p77
    %s80 = sadd.s32 %s79, 1
    %p83 = scmp.eq.s32.totalorder %s10, 1
    %p84 = scmp.ne.s32.totalorder %s79, %s81
    %p85 = scmp.eq.s32.totalorder %s10, 0
    %p86 = por %p84, %p85
    %p87 = scmp.ne.s32.totalorder %s79, %s81
    %p88 = scmp.eq.s32.totalorder %s15, 1
    %p89 = por %p87, %p88
    %p90 = scmp.ne.s32.totalorder %s81, %s82
    %p91 = scmp.eq.s32.totalorder %s15, 0
    %p92 = por %p90, %p91
    %p93 = scmp.ne.s32.totalorder %s81, %s82
    %p94 = scmp.eq.s32.totalorder %s16, 1
    %p95 = por %p93, %p94
    %p97 = scmp.ne.s32.totalorder %s82, %s96
    %p98 = scmp.eq.s32.totalorder %s16, 0
    %p99 = por %p97, %p98
    %s101 = sadd.s32 %s100, 1
    %p104 = scmp.eq.s32.totalorder %s10, 1
    %p105 = scmp.ne.s32.totalorder %s100, %s102
    %p106 = scmp.eq.s32.totalorder %s10, 0
    %p107 = por %p105, %p106
    %p108 = scmp.ne.s32.totalorder %s100, %s102
    %p109 = scmp.eq.s32.totalorder %s15, 1
    %p110 = por %p108, %p109
    %p111 = scmp.ne.s32.totalorder %s102, %s103
    %p112 = scmp.eq.s32.totalorder %s15, 0
    %p113 = por %p111, %p112
    %p114 = scmp.ne.s32.totalorder %s102, %s103
    %p115 = scmp.eq.s32.totalorder %s16, 1
    %p116 = por %p114, %p115
    %p118 = scmp.ne.s32.totalorder %s103, %s117
    %p119 = scmp.eq.s32.totalorder %s16, 0
    %p120 = por %p118, %p119
    %s121 = ssub.s32 %s17, %s29
    %s122 = ssub.s32 %s18, %s25
    %s123 = sor.u32 %s121, %s122
    %p124 = scmp.eq.s32.totalorder %s123, 0
    %s126 = sadd.s32 %s125, 1
    %s127 = scalar_select %p124, %s125, %s126
    %p130 = pneg %p124
    %p131 = scmp.eq.s32.totalorder %s10, 1
    %p132 = por %p130, %p131
    %p133 = scmp.ne.s32.totalorder %s125, %s128
    %p134 = scmp.eq.s32.totalorder %s10, 0
    %p135 = por %p133, %p134
    %p136 = scmp.ne.s32.totalorder %s125, %s128
    %p137 = scmp.eq.s32.totalorder %s15, 1
    %p138 = por %p136, %p137
    %p139 = scmp.ne.s32.totalorder %s128, %s129
    %p140 = scmp.eq.s32.totalorder %s15, 0
    %p141 = por %p139, %p140
    %p142 = scmp.ne.s32.totalorder %s128, %s129
    %p143 = scmp.eq.s32.totalorder %s16, 1
    %p144 = por %p142, %p143
    %p146 = scmp.ne.s32.totalorder %s129, %s145
    %p147 = scmp.eq.s32.totalorder %s16, 0
    %p148 = por %p146, %p147
    %p149 = scmp.le.s32.totalorder 1, %s10
    %p150 = scmp.lt.s32.totalorder %s10, 3
    %p151 = pnand %p149, %p150
    %p152 = pneg %p151
    // Predicated region
    $region9: #{double_conv_encoder_forward.2} parent=5 // pred_check
      _
    $region10: #{double_conv_encoder_forward.2} parent=5 // pred_check_branch
      %154 = sbr.rel (%p151) target = $region12
    $region11: #{double_conv_encoder_forward.2} parent=5 // pred_region
      %s155 = ssub.s32 %s10, 1
      // Predicated region
      $region13: #{double_conv_encoder_forward.2} parent=11 // pred_check
        %p156 = pneg %p71
      $region14: #{double_conv_encoder_forward.2} parent=11 // pred_check_branch
        %158 = sbr.rel (%p156) target = $region16
      $region15: #{double_conv_encoder_forward.2} parent=11 // pred_region
        _
      $region16: #{double_conv_encoder_forward.2} parent=11 // pred_fallthru
        _
      // Predicated region
      $region17: #{double_conv_encoder_forward.2} parent=11 // pred_check
        %p159 = pneg %p92
      $region18: #{double_conv_encoder_forward.2} parent=11 // pred_check_branch
        %161 = sbr.rel (%p159) target = $region20
      $region19: #{double_conv_encoder_forward.2} parent=11 // pred_region
        _
      $region20: #{double_conv_encoder_forward.2} parent=11 // pred_fallthru
        _
      // Predicated region
      $region21: #{double_conv_encoder_forward.2} parent=11 // pred_check
        %p162 = pneg %p113
      $region22: #{double_conv_encoder_forward.2} parent=11 // pred_check_branch
        %164 = sbr.rel (%p162) target = $region24
      $region23: #{double_conv_encoder_forward.2} parent=11 // pred_region
        _
      $region24: #{double_conv_encoder_forward.2} parent=11 // pred_fallthru
        _
    $region12: #{double_conv_encoder_forward.2} parent=5 // pred_fallthru
      _
    %p165 = scmp.lt.s32.totalorder %s10, 2
    // Predicated region
    $region25: #{double_conv_encoder_forward.2} parent=5 // pred_check
      %p166 = pneg %p165
    $region26: #{double_conv_encoder_forward.2} parent=5 // pred_check_branch
      %168 = sbr.rel (%p166) target = $region28
    $region27: #{double_conv_encoder_forward.2} parent=5 // pred_region
      // Predicated region
      $region29: #{double_conv_encoder_forward.2} parent=27 // pred_check
        %p169 = pneg %p44
      $region30: #{double_conv_encoder_forward.2} parent=27 // pred_check_branch
        %171 = sbr.rel (%p169) target = $region32
      $region31: #{double_conv_encoder_forward.2} parent=27 // pred_region
        %s172 = smul.u32 32, %s18
        %p173 = scmp.lt.s32.totalorder %s17, 1
        %s174 = scalar_select %p173, %s17, 1
        %p175 = scmp.lt.s32.totalorder %s172, 31
        %s176 = scalar_select %p175, %s172, 31
        %s177 = smul.addr %s174, 32
        %s178 = sadd.s32 %s176, %s177
        %s179 = smul.addr %s178, 4
        %s180 = scalar_lea.vmem %s0, %s179
        %s181 = smul.u32 32, %s18
      $region32: #{double_conv_encoder_forward.2} parent=27 // pred_fallthru
        _
    $region28: #{double_conv_encoder_forward.2} parent=5 // pred_fallthru
      _
    %p182 = scmp.le.s32.totalorder 1, %s10
    %p183 = scmp.lt.s32.totalorder %s10, 3
    %p184 = pnand %p182, %p183
    %p185 = pneg %p184
    // Predicated region
    $region33: #{double_conv_encoder_forward.2} parent=5 // pred_check
      _
    $region34: #{double_conv_encoder_forward.2} parent=5 // pred_check_branch
      %187 = sbr.rel (%p184) target = $region36
    $region35: #{double_conv_encoder_forward.2} parent=5 // pred_region
      %s188 = ssub.s32 %s10, 1
      %s189 = smul.u32 32, %s20
      %p190 = scmp.lt.s32.totalorder %s19, 1
      %s191 = scalar_select %p190, %s19, 1
      %p192 = scmp.lt.s32.totalorder %s189, 31
      %s193 = scalar_select %p192, %s189, 31
      %s194 = smul.addr %s191, 32
      %s195 = sadd.s32 %s193, %s194
      %s196 = smul.addr %s195, 4
      %s197 = scalar_lea.vmem %s0, %s196
      %p198 = pneg %p50
      %p199 = pneg %p47
      %p200 = pneg %p71
      %p201 = pneg %p68
      %p202 = pneg %p92
      %p203 = pneg %p89
      %p204 = pneg %p113
      %p205 = pneg %p110
      %p206 = pneg %p141
      %p207 = pneg %p138
      %s208 = smul.u32 32, %s20
      %p209 = scmp.lt.s32.totalorder %s19, 1
      %s210 = scalar_select %p209, %s19, 1
      %p211 = scmp.lt.s32.totalorder %s208, 31
      %s212 = scalar_select %p211, %s208, 31
      %s213 = smul.addr %s210, 32
      %s214 = sadd.s32 %s212, %s213
      %s215 = smul.addr %s214, 4
      %s216 = scalar_lea.vmem %s4, %s215
      %s217 = smul.u32 32, %s20
      %p218 = scmp.lt.s32.totalorder %s19, 1
      %s219 = scalar_select %p218, %s19, 1
      %p220 = scmp.lt.s32.totalorder %s217, 31
      %s221 = scalar_select %p220, %s217, 31
      %s222 = smul.addr %s219, 32
      %s223 = sadd.s32 %s221, %s222
      %s224 = smul.addr %s223, 4
      %s225 = scalar_lea.vmem %s0, %s224
      %s226 = smul.u32 32, %s20
      %s227 = smul.u32 32, %s20
      %p228 = scmp.lt.s32.totalorder %s19, 1
      %s229 = scalar_select %p228, %s19, 1
      %p230 = scmp.lt.s32.totalorder %s227, 31
      %s231 = scalar_select %p230, %s227, 31
      %s232 = smul.addr %s229, 32
      %s233 = sadd.s32 %s231, %s232
      %s234 = smul.addr %s233, 4
      %s235 = scalar_lea.vmem %s4, %s234
      %s236 = smul.u32 32, %s20
      %v238 = vld [vmem:[%s225] sm:$0xf]
      %v239 = vld [vmem:[%s225 + $0x4] sm:$0xf]
      %v240 = vld [vmem:[%s225 + $0x8] sm:$0xf]
      %v241 = vld [vmem:[%s225 + $0xc] sm:$0xf]
      %v242 = vld [vmem:[%s225 + $0x10] sm:$0xf]
      %v243 = vld [vmem:[%s225 + $0x14] sm:$0xf]
      %v244 = vld [vmem:[%s225 + $0x18] sm:$0xf]
      %v245 = vld [vmem:[%s225 + $0x1c] sm:$0xf]
      %v246 = vld [vmem:[%s225 + $0x20] sm:$0xf]
      %v247 = vld [vmem:[%s225 + $0x24] sm:$0xf]
      %v248 = vld [vmem:[%s225 + $0x28] sm:$0xf]
      %v249 = vld [vmem:[%s225 + $0x2c] sm:$0xf]
      %v250 = vld [vmem:[%s225 + $0x30] sm:$0xf]
      %v251 = vld [vmem:[%s225 + $0x34] sm:$0xf]
      %v252 = vld [vmem:[%s225 + $0x38] sm:$0xf]
      %v253 = vld [vmem:[%s225 + $0x3c] sm:$0xf]
      %v254 = vld [vmem:[%s225 + $0x40] sm:$0xf]
      %v255 = vld [vmem:[%s225 + $0x44] sm:$0xf]
      %v256 = vld [vmem:[%s225 + $0x48] sm:$0xf]
      %v257 = vld [vmem:[%s225 + $0x4c] sm:$0xf]
      %v258 = vld [vmem:[%s225 + $0x50] sm:$0xf]
      %v259 = vld [vmem:[%s225 + $0x54] sm:$0xf]
      %v260 = vld [vmem:[%s225 + $0x58] sm:$0xf]
      %v261 = vld [vmem:[%s225 + $0x5c] sm:$0xf]
      %v262 = vld [vmem:[%s225 + $0x60] sm:$0xf]
      %v263 = vld [vmem:[%s225 + $0x64] sm:$0xf]
      %v264 = vld [vmem:[%s225 + $0x68] sm:$0xf]
      %v265 = vld [vmem:[%s225 + $0x6c] sm:$0xf]
      %v266 = vld [vmem:[%s225 + $0x70] sm:$0xf]
      %v267 = vld [vmem:[%s225 + $0x74] sm:$0xf]
      %v268 = vld [vmem:[%s225 + $0x78] sm:$0xf]
      %v269 = vld [vmem:[%s225 + $0x7c] sm:$0xf]
      %v270 = vld [vmem:[%s1] sm:$0xf]
      %v271 = vld [vmem:[%s1 + $0x4] sm:$0xf]
      %v272 = vld [vmem:[%s1 + $0x8] sm:$0xf]
      %v273 = vld [vmem:[%s1 + $0xc] sm:$0xf]
      %v274 = vld [vmem:[%s1 + $0x10] sm:$0x3]
      %v307 = vunpack.c.l.b16 %v238
      %v308 = vunpack.c.l.b16 %v239
      %v309 = vunpack.c.l.b16 %v240
      %v310 = vunpack.c.l.b16 %v241
      %v311 = vunpack.c.l.b16 %v242
      %v312 = vunpack.c.l.b16 %v243
      %v313 = vunpack.c.l.b16 %v244
      %v314 = vunpack.c.l.b16 %v245
      %v315 = vunpack.c.l.b16 %v246
      %v316 = vunpack.c.l.b16 %v247
      %v317 = vunpack.c.l.b16 %v248
      %v318 = vunpack.c.l.b16 %v249
      %v319 = vunpack.c.l.b16 %v250
      %v320 = vunpack.c.l.b16 %v251
      %v321 = vunpack.c.l.b16 %v252
      %v322 = vunpack.c.l.b16 %v253
      %v323 = vunpack.c.l.b16 %v254
      %v324 = vunpack.c.l.b16 %v255
      %v325 = vunpack.c.l.b16 %v256
      %v326 = vunpack.c.l.b16 %v257
      %v327 = vunpack.c.l.b16 %v258
      %v328 = vunpack.c.l.b16 %v259
      %v329 = vunpack.c.l.b16 %v260
      %v330 = vunpack.c.l.b16 %v261
      %v331 = vunpack.c.l.b16 %v262
      %v332 = vunpack.c.l.b16 %v263
      %v333 = vunpack.c.l.b16 %v264
      %v334 = vunpack.c.l.b16 %v265
      %v335 = vunpack.c.l.b16 %v266
      %v336 = vunpack.c.l.b16 %v267
      %v337 = vunpack.c.l.b16 %v268
      %v338 = vunpack.c.l.b16 %v269
      %v339 = vpack.c.b16 %v308, %v307
      %v340 = vpack.c.b16 %v310, %v309
      %v341 = vpack.c.b16 %v312, %v311
      %v342 = vpack.c.b16 %v314, %v313
      %v343 = vpack.c.b16 %v316, %v315
      %v344 = vpack.c.b16 %v318, %v317
      %v345 = vpack.c.b16 %v320, %v319
      %v346 = vpack.c.b16 %v322, %v321
      %v347 = vpack.c.b16 %v324, %v323
      %v348 = vpack.c.b16 %v326, %v325
      %v349 = vpack.c.b16 %v328, %v327
      %v350 = vpack.c.b16 %v330, %v329
      %v351 = vpack.c.b16 %v332, %v331
      %v352 = vpack.c.b16 %v334, %v333
      %v353 = vpack.c.b16 %v336, %v335
      %v354 = vpack.c.b16 %v338, %v337
      %v360 = vunpack.c.l.b16 %v270
      %v361 = vunpack.c.l.b16 %v271
      %v362 = vunpack.c.l.b16 %v272
      %v363 = vunpack.c.l.b16 %v273
      %v364 = vunpack.c.l.b16 %v274
      %v365 = vpack.c.b16 %v361, %v360
      %v366 = vpack.c.b16 %v363, %v362
      %v367 = vpack.c.b16 %v364, %v364
      %vm370 = vcmask 293888
      %v372 = vsel %vm370, %v339, 0
      %v375 = vsel %vm370, %v340, 0
      %v378 = vsel %vm370, %v341, 0
      %v381 = vsel %vm370, %v342, 0
      %v384 = vsel %vm370, %v343, 0
      %v387 = vsel %vm370, %v344, 0
      %v390 = vsel %vm370, %v345, 0
      %v393 = vsel %vm370, %v346, 0
      %v396 = vsel %vm370, %v347, 0
      %v399 = vsel %vm370, %v348, 0
      %v402 = vsel %vm370, %v349, 0
      %v405 = vsel %vm370, %v350, 0
      %v408 = vsel %vm370, %v351, 0
      %v411 = vsel %vm370, %v352, 0
      %v414 = vsel %vm370, %v353, 0
      %v417 = vsel %vm370, %v354, 0
      %vm419 = vcmask 1041408
      %v421 = vsel %vm419, %v367, 0
      %423 = vmatprep.subr.bf16.mxu0 0
      %424 = vmatpush1.bf16.msra.mxu0 %v365
      %425 = vmatprep.subr.bf16.mxu0 0
      %426 = vmatpush1.bf16.msra.mxu0 %v366
      %427 = vmatprep.subr.bf16.mxu0 0
      %428 = vmatpush1.bf16.msra.mxu0 %v421
      %429 = vmatprep.subr.bf16.mxu0 0
      %430 = vmatpush1.bf16.msra.mxu0 0
      %431 = vmatprep.subr.bf16.mxu0 0
      %432 = vmatpush1.bf16.msra.mxu0 0
      %433 = vmatprep.subr.bf16.mxu0 0
      %434 = vmatpush1.bf16.msra.mxu0 0
      %435 = vmatprep.subr.bf16.mxu0 0
      %436 = vmatpush1.bf16.msra.mxu0 0
      %437 = vmatprep.subr.bf16.mxu0 0
      %438 = vmatpush1.bf16.msra.mxu0 0
      %439 = vmatprep.subr.bf16.mxu0 0
      %440 = vmatpush1.bf16.msra.mxu0 0
      %441 = vmatprep.subr.bf16.mxu0 0
      %442 = vmatpush1.bf16.msra.mxu0 0
      %443 = vmatprep.subr.bf16.mxu0 0
      %444 = vmatpush1.bf16.msra.mxu0 0
      %445 = vmatprep.subr.bf16.mxu0 0
      %446 = vmatpush1.bf16.msra.mxu0 0
      %447 = vmatprep.subr.bf16.mxu0 0
      %448 = vmatpush1.bf16.msra.mxu0 0
      %449 = vmatprep.subr.bf16.mxu0 0
      %450 = vmatpush1.bf16.msra.mxu0 0
      %451 = vmatprep.subr.bf16.mxu0 0
      %452 = vmatpush1.bf16.msra.mxu0 0
      %453 = vmatprep.subr.bf16.mxu0 0
      %454 = vmatpush1.bf16.msra.mxu0 0
      %455 = vmatprep.mubr.bf16.mxu0 0
      %456 = vmatmul.mubr.bf16.gmra.mrb[0].mxu0 %v372
      %v457 = vpop.f32.mrb[0].mxu0
      %v458 = vadd.f32 0.0, %v457
      %v459 = vpop.f32.mrb[0].mxu0
      %v460 = vpop.f32.mrb[0].mxu0
      %v461 = vadd.f32 0.0, %v460
      %v462 = vpop.f32.mrb[0].mxu0
      %463 = vmatprep.mubr.bf16.mxu0 0
      %464 = vmatmul.mubr.bf16.gmra.mrb[0].mxu0 %v375
      %v465 = vpop.f32.mrb[0].mxu0
      %v466 = vadd.f32 0.0, %v465
      %v467 = vpop.f32.mrb[0].mxu0
      %v468 = vpop.f32.mrb[0].mxu0
      %v469 = vadd.f32 0.0, %v468
      %v470 = vpop.f32.mrb[0].mxu0
      %471 = vmatprep.mubr.bf16.mxu0 0
      %472 = vmatmul.mubr.bf16.gmra.mrb[0].mxu0 %v378
      %v473 = vpop.f32.mrb[0].mxu0
      %v474 = vadd.f32 0.0, %v473
      %v475 = vpop.f32.mrb[0].mxu0
      %v476 = vpop.f32.mrb[0].mxu0
      %v477 = vadd.f32 0.0, %v476
      %v478 = vpop.f32.mrb[0].mxu0
      %479 = vmatprep.mubr.bf16.mxu0 0
      %480 = vmatmul.mubr.bf16.gmra.mrb[0].mxu0 %v381
      %v481 = vpop.f32.mrb[0].mxu0
      %v482 = vadd.f32 0.0, %v481
      %v483 = vpop.f32.mrb[0].mxu0
      %v484 = vpop.f32.mrb[0].mxu0
      %v485 = vadd.f32 0.0, %v484
      %v486 = vpop.f32.mrb[0].mxu0
      %487 = vmatprep.mubr.bf16.mxu0 0
      %488 = vmatmul.mubr.bf16.gmra.mrb[0].mxu0 %v384
      %v489 = vpop.f32.mrb[0].mxu0
      %v490 = vadd.f32 0.0, %v489
      %v491 = vpop.f32.mrb[0].mxu0
      %v492 = vpop.f32.mrb[0].mxu0
      %v493 = vadd.f32 0.0, %v492
      %v494 = vpop.f32.mrb[0].mxu0
      %495 = vmatprep.mubr.bf16.mxu0 0
      %496 = vmatmul.mubr.bf16.gmra.mrb[0].mxu0 %v387
      %v497 = vpop.f32.mrb[0].mxu0
      %v498 = vadd.f32 0.0, %v497
      %v499 = vpop.f32.mrb[0].mxu0
      %v500 = vpop.f32.mrb[0].mxu0
      %v501 = vadd.f32 0.0, %v500
      %v502 = vpop.f32.mrb[0].mxu0
      %503 = vmatprep.mubr.bf16.mxu0 0
      %504 = vmatmul.mubr.bf16.gmra.mrb[0].mxu0 %v390
      %v505 = vpop.f32.mrb[0].mxu0
      %v506 = vadd.f32 0.0, %v505
      %v507 = vpop.f32.mrb[0].mxu0
      %v508 = vpop.f32.mrb[0].mxu0
      %v509 = vadd.f32 0.0, %v508
      %v510 = vpop.f32.mrb[0].mxu0
      %511 = vmatprep.mubr.bf16.mxu0 0
      %512 = vmatmul.mubr.bf16.gmra.mrb[0].mxu0 %v393
      %v513 = vpop.f32.mrb[0].mxu0
      %v514 = vadd.f32 0.0, %v513
      %v515 = vpop.f32.mrb[0].mxu0
      %v516 = vpop.f32.mrb[0].mxu0
      %v517 = vadd.f32 0.0, %v516
      %v518 = vpop.f32.mrb[0].mxu0
      %519 = vmatprep.mubr.bf16.mxu0 0
      %520 = vmatmul.mubr.bf16.gmra.mrb[0].mxu0 %v396
      %v521 = vpop.f32.mrb[0].mxu0
      %v522 = vadd.f32 0.0, %v521
      %v523 = vpop.f32.mrb[0].mxu0
      %v524 = vpop.f32.mrb[0].mxu0
      %v525 = vadd.f32 0.0, %v524
      %v526 = vpop.f32.mrb[0].mxu0
      %527 = vmatprep.mubr.bf16.mxu0 0
      %528 = vmatmul.mubr.bf16.gmra.mrb[0].mxu0 %v399
      %v529 = vpop.f32.mrb[0].mxu0
      %v530 = vadd.f32 0.0, %v529
      %v531 = vpop.f32.mrb[0].mxu0
      %v532 = vpop.f32.mrb[0].mxu0
      %v533 = vadd.f32 0.0, %v532
      %v534 = vpop.f32.mrb[0].mxu0
      %535 = vmatprep.mubr.bf16.mxu0 0
      %536 = vmatmul.mubr.bf16.gmra.mrb[0].mxu0 %v402
      %v537 = vpop.f32.mrb[0].mxu0
      %v538 = vadd.f32 0.0, %v537
      %v539 = vpop.f32.mrb[0].mxu0
      %v540 = vpop.f32.mrb[0].mxu0
      %v541 = vadd.f32 0.0, %v540
      %v542 = vpop.f32.mrb[0].mxu0
      %543 = vmatprep.mubr.bf16.mxu0 0
      %544 = vmatmul.mubr.bf16.gmra.mrb[0].mxu0 %v405
      %v545 = vpop.f32.mrb[0].mxu0
      %v546 = vadd.f32 0.0, %v545
      %v547 = vpop.f32.mrb[0].mxu0
      %v548 = vpop.f32.mrb[0].mxu0
      %v549 = vadd.f32 0.0, %v548
      %v550 = vpop.f32.mrb[0].mxu0
      %551 = vmatprep.mubr.bf16.mxu0 0
      %552 = vmatmul.mubr.bf16.gmra.mrb[0].mxu0 %v408
      %v553 = vpop.f32.mrb[0].mxu0
      %v554 = vadd.f32 0.0, %v553
      %v555 = vpop.f32.mrb[0].mxu0
      %v556 = vpop.f32.mrb[0].mxu0
      %v557 = vadd.f32 0.0, %v556
      %v558 = vpop.f32.mrb[0].mxu0
      %559 = vmatprep.mubr.bf16.mxu0 0
      %560 = vmatmul.mubr.bf16.gmra.mrb[0].mxu0 %v411
      %v561 = vpop.f32.mrb[0].mxu0
      %v562 = vadd.f32 0.0, %v561
      %v563 = vpop.f32.mrb[0].mxu0
      %v564 = vpop.f32.mrb[0].mxu0
      %v565 = vadd.f32 0.0, %v564
      %v566 = vpop.f32.mrb[0].mxu0
      %567 = vmatprep.mubr.bf16.mxu0 0
      %568 = vmatmul.mubr.bf16.gmra.mrb[0].mxu0 %v414
      %v569 = vpop.f32.mrb[0].mxu0
      %v570 = vadd.f32 0.0, %v569
      %v571 = vpop.f32.mrb[0].mxu0
      %v572 = vpop.f32.mrb[0].mxu0
      %v573 = vadd.f32 0.0, %v572
      %v574 = vpop.f32.mrb[0].mxu0
      %575 = vmatprep.mubr.bf16.mxu0 0
      %576 = vmatmul.mubr.bf16.gmra.mrb[0].mxu0 %v417
      %v577 = vpop.f32.mrb[0].mxu0
      %v578 = vadd.f32 0.0, %v577
      %v579 = vpop.f32.mrb[0].mxu0
      %v580 = vpop.f32.mrb[0].mxu0
      %v581 = vadd.f32 0.0, %v580
      %v582 = vpop.f32.mrb[0].mxu0
      %583 = vdwg.mxu0
      %v584 = vld [vmem:[%s2] sm:$0x1]
      %v586 = vlaneseq
      %v587 = vshrl.u32 %v586, 7
      %v588 = vsub.s32 0, %v587
      %v589 = vrot.slane %v584, %v588
      %v591 = vmul.f32 %v458, %v589
      %v592 = vmul.f32 %v461, %v589
      %v593 = vmul.f32 %v466, %v589
      %v594 = vmul.f32 %v469, %v589
      %v595 = vmul.f32 %v474, %v589
      %v596 = vmul.f32 %v477, %v589
      %v597 = vmul.f32 %v482, %v589
      %v598 = vmul.f32 %v485, %v589
      %v599 = vmul.f32 %v490, %v589
      %v600 = vmul.f32 %v493, %v589
      %v601 = vmul.f32 %v498, %v589
      %v602 = vmul.f32 %v501, %v589
      %v603 = vmul.f32 %v506, %v589
      %v604 = vmul.f32 %v509, %v589
      %v605 = vmul.f32 %v514, %v589
      %v606 = vmul.f32 %v517, %v589
      %v607 = vmul.f32 %v522, %v589
      %v608 = vmul.f32 %v525, %v589
      %v609 = vmul.f32 %v530, %v589
      %v610 = vmul.f32 %v533, %v589
      %v611 = vmul.f32 %v538, %v589
      %v612 = vmul.f32 %v541, %v589
      %v613 = vmul.f32 %v546, %v589
      %v614 = vmul.f32 %v549, %v589
      %v615 = vmul.f32 %v554, %v589
      %v616 = vmul.f32 %v557, %v589
      %v617 = vmul.f32 %v562, %v589
      %v618 = vmul.f32 %v565, %v589
      %v619 = vmul.f32 %v570, %v589
      %v620 = vmul.f32 %v573, %v589
      %v621 = vmul.f32 %v578, %v589
      %v622 = vmul.f32 %v581, %v589
      %v623 = vld [vmem:[%s3] sm:$0x1]
      %v625 = vlaneseq
      %v626 = vshrl.u32 %v625, 7
      %v627 = vsub.s32 0, %v626
      %v628 = vrot.slane %v623, %v627
      %v630 = vadd.f32 %v591, %v628
      %v631 = vadd.f32 %v592, %v628
      %v632 = vadd.f32 %v593, %v628
      %v633 = vadd.f32 %v594, %v628
      %v634 = vadd.f32 %v595, %v628
      %v635 = vadd.f32 %v596, %v628
      %v636 = vadd.f32 %v597, %v628
      %v637 = vadd.f32 %v598, %v628
      %v638 = vadd.f32 %v599, %v628
      %v639 = vadd.f32 %v600, %v628
      %v640 = vadd.f32 %v601, %v628
      %v641 = vadd.f32 %v602, %v628
      %v642 = vadd.f32 %v603, %v628
      %v643 = vadd.f32 %v604, %v628
      %v644 = vadd.f32 %v605, %v628
      %v645 = vadd.f32 %v606, %v628
      %v646 = vadd.f32 %v607, %v628
      %v647 = vadd.f32 %v608, %v628
      %v648 = vadd.f32 %v609, %v628
      %v649 = vadd.f32 %v610, %v628
      %v650 = vadd.f32 %v611, %v628
      %v651 = vadd.f32 %v612, %v628
      %v652 = vadd.f32 %v613, %v628
      %v653 = vadd.f32 %v614, %v628
      %v654 = vadd.f32 %v615, %v628
      %v655 = vadd.f32 %v616, %v628
      %v656 = vadd.f32 %v617, %v628
      %v657 = vadd.f32 %v618, %v628
      %v658 = vadd.f32 %v619, %v628
      %v659 = vadd.f32 %v620, %v628
      %v660 = vadd.f32 %v621, %v628
      %v661 = vadd.f32 %v622, %v628
      %v662 = vmax.f32 %v630, 0.0
      %v663 = vmax.f32 %v631, 0.0
      %v664 = vmax.f32 %v632, 0.0
      %v665 = vmax.f32 %v633, 0.0
      %v666 = vmax.f32 %v634, 0.0
      %v667 = vmax.f32 %v635, 0.0
      %v668 = vmax.f32 %v636, 0.0
      %v669 = vmax.f32 %v637, 0.0
      %v670 = vmax.f32 %v638, 0.0
      %v671 = vmax.f32 %v639, 0.0
      %v672 = vmax.f32 %v640, 0.0
      %v673 = vmax.f32 %v641, 0.0
      %v674 = vmax.f32 %v642, 0.0
      %v675 = vmax.f32 %v643, 0.0
      %v676 = vmax.f32 %v644, 0.0
      %v677 = vmax.f32 %v645, 0.0
      %v678 = vmax.f32 %v646, 0.0
      %v679 = vmax.f32 %v647, 0.0
      %v680 = vmax.f32 %v648, 0.0
      %v681 = vmax.f32 %v649, 0.0
      %v682 = vmax.f32 %v650, 0.0
      %v683 = vmax.f32 %v651, 0.0
      %v684 = vmax.f32 %v652, 0.0
      %v685 = vmax.f32 %v653, 0.0
      %v686 = vmax.f32 %v654, 0.0
      %v687 = vmax.f32 %v655, 0.0
      %v688 = vmax.f32 %v656, 0.0
      %v689 = vmax.f32 %v657, 0.0
      %v690 = vmax.f32 %v658, 0.0
      %v691 = vmax.f32 %v659, 0.0
      %v692 = vmax.f32 %v660, 0.0
      %v693 = vmax.f32 %v661, 0.0
      %v694 = vpack.c.bf16 %v663, %v662
      %v695 = vpack.c.bf16 %v665, %v664
      %v696 = vpack.c.bf16 %v667, %v666
      %v697 = vpack.c.bf16 %v669, %v668
      %v698 = vpack.c.bf16 %v671, %v670
      %v699 = vpack.c.bf16 %v673, %v672
      %v700 = vpack.c.bf16 %v675, %v674
      %v701 = vpack.c.bf16 %v677, %v676
      %v702 = vpack.c.bf16 %v679, %v678
      %v703 = vpack.c.bf16 %v681, %v680
      %v704 = vpack.c.bf16 %v683, %v682
      %v705 = vpack.c.bf16 %v685, %v684
      %v706 = vpack.c.bf16 %v687, %v686
      %v707 = vpack.c.bf16 %v689, %v688
      %v708 = vpack.c.bf16 %v691, %v690
      %v709 = vpack.c.bf16 %v693, %v692
      %v726 = vunpack.c.l.b16 %v694
      %v727 = vunpack.c.h.b16 %v694
      %v728 = vunpack.c.l.b16 %v695
      %v729 = vunpack.c.h.b16 %v695
      %v730 = vunpack.c.l.b16 %v696
      %v731 = vunpack.c.h.b16 %v696
      %v732 = vunpack.c.l.b16 %v697
      %v733 = vunpack.c.h.b16 %v697
      %v734 = vunpack.c.l.b16 %v698
      %v735 = vunpack.c.h.b16 %v698
      %v736 = vunpack.c.l.b16 %v699
      %v737 = vunpack.c.h.b16 %v699
      %v738 = vunpack.c.l.b16 %v700
      %v739 = vunpack.c.h.b16 %v700
      %v740 = vunpack.c.l.b16 %v701
      %v741 = vunpack.c.h.b16 %v701
      %v742 = vunpack.c.l.b16 %v702
      %v743 = vunpack.c.h.b16 %v702
      %v744 = vunpack.c.l.b16 %v703
      %v745 = vunpack.c.h.b16 %v703
      %v746 = vunpack.c.l.b16 %v704
      %v747 = vunpack.c.h.b16 %v704
      %v748 = vunpack.c.l.b16 %v705
      %v749 = vunpack.c.h.b16 %v705
      %v750 = vunpack.c.l.b16 %v706
      %v751 = vunpack.c.h.b16 %v706
      %v752 = vunpack.c.l.b16 %v707
      %v753 = vunpack.c.h.b16 %v707
      %v754 = vunpack.c.l.b16 %v708
      %v755 = vunpack.c.h.b16 %v708
      %v756 = vunpack.c.l.b16 %v709
      %v757 = vunpack.c.h.b16 %v709
      %v758 = vpack.c.b16 %v726, %v726
      %v759 = vpack.c.b16 %v727, %v727
      %v760 = vpack.c.b16 %v728, %v728
      %v761 = vpack.c.b16 %v729, %v729
      %v762 = vpack.c.b16 %v730, %v730
      %v763 = vpack.c.b16 %v731, %v731
      %v764 = vpack.c.b16 %v732, %v732
      %v765 = vpack.c.b16 %v733, %v733
      %v766 = vpack.c.b16 %v734, %v734
      %v767 = vpack.c.b16 %v735, %v735
      %v768 = vpack.c.b16 %v736, %v736
      %v769 = vpack.c.b16 %v737, %v737
      %v770 = vpack.c.b16 %v738, %v738
      %v771 = vpack.c.b16 %v739, %v739
      %v772 = vpack.c.b16 %v740, %v740
      %v773 = vpack.c.b16 %v741, %v741
      %v774 = vpack.c.b16 %v742, %v742
      %v775 = vpack.c.b16 %v743, %v743
      %v776 = vpack.c.b16 %v744, %v744
      %v777 = vpack.c.b16 %v745, %v745
      %v778 = vpack.c.b16 %v746, %v746
      %v779 = vpack.c.b16 %v747, %v747
      %v780 = vpack.c.b16 %v748, %v748
      %v781 = vpack.c.b16 %v749, %v749
      %v782 = vpack.c.b16 %v750, %v750
      %v783 = vpack.c.b16 %v751, %v751
      %v784 = vpack.c.b16 %v752, %v752
      %v785 = vpack.c.b16 %v753, %v753
      %v786 = vpack.c.b16 %v754, %v754
      %v787 = vpack.c.b16 %v755, %v755
      %v788 = vpack.c.b16 %v756, %v756
      %v789 = vpack.c.b16 %v757, %v757
      %vm822 = vcmask 257024
      %823 = vst.msk [vmem:[%s235] sm:$0xf] %vm822, %v758
      %824 = vst.msk [vmem:[%s235 + $0x4] sm:$0xf] %vm822, %v759
      %825 = vst.msk [vmem:[%s235 + $0x8] sm:$0xf] %vm822, %v760
      %826 = vst.msk [vmem:[%s235 + $0xc] sm:$0xf] %vm822, %v761
      %827 = vst.msk [vmem:[%s235 + $0x10] sm:$0xf] %vm822, %v762
      %828 = vst.msk [vmem:[%s235 + $0x14] sm:$0xf] %vm822, %v763
      %829 = vst.msk [vmem:[%s235 + $0x18] sm:$0xf] %vm822, %v764
      %830 = vst.msk [vmem:[%s235 + $0x1c] sm:$0xf] %vm822, %v765
      %831 = vst.msk [vmem:[%s235 + $0x20] sm:$0xf] %vm822, %v766
      %832 = vst.msk [vmem:[%s235 + $0x24] sm:$0xf] %vm822, %v767
      %833 = vst.msk [vmem:[%s235 + $0x28] sm:$0xf] %vm822, %v768
      %834 = vst.msk [vmem:[%s235 + $0x2c] sm:$0xf] %vm822, %v769
      %835 = vst.msk [vmem:[%s235 + $0x30] sm:$0xf] %vm822, %v770
      %836 = vst.msk [vmem:[%s235 + $0x34] sm:$0xf] %vm822, %v771
      %837 = vst.msk [vmem:[%s235 + $0x38] sm:$0xf] %vm822, %v772
      %838 = vst.msk [vmem:[%s235 + $0x3c] sm:$0xf] %vm822, %v773
      %839 = vst.msk [vmem:[%s235 + $0x40] sm:$0xf] %vm822, %v774
      %840 = vst.msk [vmem:[%s235 + $0x44] sm:$0xf] %vm822, %v775
      %841 = vst.msk [vmem:[%s235 + $0x48] sm:$0xf] %vm822, %v776
      %842 = vst.msk [vmem:[%s235 + $0x4c] sm:$0xf] %vm822, %v777
      %843 = vst.msk [vmem:[%s235 + $0x50] sm:$0xf] %vm822, %v778
      %844 = vst.msk [vmem:[%s235 + $0x54] sm:$0xf] %vm822, %v779
      %845 = vst.msk [vmem:[%s235 + $0x58] sm:$0xf] %vm822, %v780
      %846 = vst.msk [vmem:[%s235 + $0x5c] sm:$0xf] %vm822, %v781
      %847 = vst.msk [vmem:[%s235 + $0x60] sm:$0xf] %vm822, %v782
      %848 = vst.msk [vmem:[%s235 + $0x64] sm:$0xf] %vm822, %v783
      %849 = vst.msk [vmem:[%s235 + $0x68] sm:$0xf] %vm822, %v784
      %850 = vst.msk [vmem:[%s235 + $0x6c] sm:$0xf] %vm822, %v785
      %851 = vst.msk [vmem:[%s235 + $0x70] sm:$0xf] %vm822, %v786
      %852 = vst.msk [vmem:[%s235 + $0x74] sm:$0xf] %vm822, %v787
      %853 = vst.msk [vmem:[%s235 + $0x78] sm:$0xf] %vm822, %v788
      %854 = vst.msk [vmem:[%s235 + $0x7c] sm:$0xf] %vm822, %v789
      %s855 = smul.u32 32, %s20
      %p856 = scmp.lt.s32.totalorder %s19, 1
      %s857 = scalar_select %p856, %s19, 1
      %p858 = scmp.lt.s32.totalorder %s855, 31
      %s859 = scalar_select %p858, %s855, 31
      %s860 = smul.addr %s857, 32
      %s861 = sadd.s32 %s859, %s860
      %s862 = smul.addr %s861, 4
      %s863 = scalar_lea.vmem %s4, %s862
      // Predicated region
      $region37: #{double_conv_encoder_forward.2} parent=35 // pred_check
        %p864 = pneg %p138
      $region38: #{double_conv_encoder_forward.2} parent=35 // pred_check_branch
        %866 = sbr.rel (%p864) target = $region40
      $region39: #{double_conv_encoder_forward.2} parent=35 // pred_region
        %s867 = smul.u32 32, %s20
      $region40: #{double_conv_encoder_forward.2} parent=35 // pred_fallthru
        _
    $region36: #{double_conv_encoder_forward.2} parent=5 // pred_fallthru
      _
    %p868 = scmp.le.s32.totalorder 2, %s10
    // Predicated region
    $region41: #{double_conv_encoder_forward.2} parent=5 // pred_check
      %p869 = pneg %p868
    $region42: #{double_conv_encoder_forward.2} parent=5 // pred_check_branch
      %871 = sbr.rel (%p869) target = $region44
    $region43: #{double_conv_encoder_forward.2} parent=5 // pred_region
      %s872 = ssub.s32 %s10, 2
      // Predicated region
      $region45: #{double_conv_encoder_forward.2} parent=43 // pred_check
        %p873 = pneg %p144
      $region46: #{double_conv_encoder_forward.2} parent=43 // pred_check_branch
        %875 = sbr.rel (%p873) target = $region48
      $region47: #{double_conv_encoder_forward.2} parent=43 // pred_region
        %s876 = smul.u32 32, %s22
        %p877 = scmp.lt.s32.totalorder %s21, 1
        %s878 = scalar_select %p877, %s21, 1
        %p879 = scmp.lt.s32.totalorder %s876, 31
        %s880 = scalar_select %p879, %s876, 31
        %s881 = smul.addr %s878, 32
        %s882 = sadd.s32 %s880, %s881
        %s883 = smul.addr %s882, 4
        %s884 = scalar_lea.vmem %s4, %s883
      $region48: #{double_conv_encoder_forward.2} parent=43 // pred_fallthru
        _
    $region44: #{double_conv_encoder_forward.2} parent=5 // pred_fallthru
      _
  $region6: #{double_conv_encoder_forward.2} parent=0 // loop_footer
    %s14 = sadd.s32 1, %s10
  $region7: #{double_conv_encoder_forward.2} parent=0 // loop_footer_branch
    %9 = sbr.rel target = $region3
  $region8: #{double_conv_encoder_forward.2} parent=0 // loop_exit
    _

// kernel: double_conv_encoder_forward.3
$region0: #{double_conv_encoder_forward.3}
  #allocation0 [shape = 'u32[]', space=smem, size = 0x4, offset = 0x4, fixed_abs, tag = 'smem constant byte address 0x4 - core index']
  #allocation1 [shape = 'u32[144,128]{1,0:T(1,128)}', space=vmem, size = 0x12000, scoped, tag = 'internal scratch']
  %s0 = inlined_call_operand.vmem [shape: bf16[2,256,288], index: 0, kind: input, shape index: {}]
  %s1 = inlined_call_operand.vmem [shape: bf16[288,32], index: 1, kind: input, shape index: {}]
  %s2 = inlined_call_operand.vmem [shape: f32[1,32], index: 2, kind: input, shape index: {}]
  %s3 = inlined_call_operand.vmem [shape: f32[1,32], index: 3, kind: input, shape index: {}]
  %s4 = inlined_call_operand.hbm [shape: f32[2,256,32], index: 4, kind: output, shape index: {}]
  %s5 = sld [smem:[#allocation0]]
  $region49: #{double_conv_encoder_forward.3} parent=0
    _
  %s7 = ssub.s32 1, %s5
  %s8 = scalar_select 0, %s7, %s5
  $region1: #{double_conv_encoder_forward.3} parent=0
    #allocation2 [shape = 'u8[262144]{0}', space=vmem, size = 0x40000, scoped, tag = 'output window, operand 0']
    #allocation3 [shape = 's32[2]{0}', space=sflag, size = 0x8, scoped, tag = 'scoped memory for double_conv_encoder_forward.3']
    %9 = vsyncpa [#allocation3], 0
    %s10 = scalar_lea.sflag [#allocation3], 1
    %11 = vsyncpa %s10, 0
    loop: start=0, step=1, limit=4
    $region2: #{double_conv_encoder_forward.3} parent=1 // loop_pre_header
      _
    $region3: #{double_conv_encoder_forward.3} parent=1 // loop_header
      %s13 = sphi 0, %s17
      %p14 = scmp.ge.s32.totalorder %s13, 4
      %s20 = sphi 0, %s32
      %s21 = sphi 0, %s28
      %s22 = sphi 0, %s20
      %s23 = sphi 0, %s21
      %s24 = sphi 0, %s22
      %s25 = sphi 0, %s23
      %s37 = sphi 0, %s39
      %s40 = sphi 0, %s37
      %s41 = sphi 0, %s40
      %s57 = sphi 0, %s41
      %s61 = sphi 0, %s61
      %s63 = sphi 0, %s61
      %s64 = sphi 0, %s63
      %s78 = sphi 0, %s64
      %s82 = sphi 0, %s82
      %s84 = sphi 0, %s82
      %s85 = sphi 0, %s84
      %s99 = sphi 0, %s85
      %s103 = sphi 0, %s103
      %s105 = sphi 0, %s103
      %s106 = sphi 0, %s105
      %s120 = sphi 0, %s106
      %s128 = sphi 0, %s130
      %s131 = sphi 0, %s128
      %s132 = sphi 0, %s131
      %s148 = sphi 0, %s132
    $region4: #{double_conv_encoder_forward.3} parent=1 // loop_header_branch
      %16 = sbr.rel (%p14) target = $region8
    $region5: #{double_conv_encoder_forward.3} parent=1 // loop_body
      %s18 = ssub.s32 %s13, 1
      %s19 = ssub.s32 %s13, 2
      %s26 = sadd.s32 1, %s21
      %p27 = scmp.ge.s32.totalorder %s26, 1
      %s28 = scalar_select %p27, 0, %s26
      %s29 = sadd.s32 1, %s20
      %s30 = scalar_select %p27, %s29, %s20
      %p31 = scmp.ge.s32.totalorder %s30, 2
      %s32 = scalar_select %p31, 0, %s30
      %s33 = ssub.s32 %s20, %s32
      %s34 = ssub.s32 %s21, %s28
      %s35 = sor.u32 %s33, %s34
      %p36 = scmp.eq.s32.totalorder %s35, 0
      %s38 = sadd.s32 %s37, 1
      %s39 = scalar_select %p36, %s37, %s38
      %p42 = pneg %p36
      %p43 = scmp.eq.s32.totalorder %s13, 1
      %p44 = por %p42, %p43
      %p45 = scmp.ne.s32.totalorder %s37, %s40
      %p46 = scmp.eq.s32.totalorder %s13, 0
      %p47 = por %p45, %p46
      %p48 = scmp.ne.s32.totalorder %s37, %s40
      %p49 = scmp.eq.s32.totalorder %s18, 1
      %p50 = por %p48, %p49
      %p51 = scmp.ne.s32.totalorder %s40, %s41
      %p52 = scmp.eq.s32.totalorder %s18, 0
      %p53 = por %p51, %p52
      %p54 = scmp.ne.s32.totalorder %s40, %s41
      %p55 = scmp.eq.s32.totalorder %s19, 1
      %p56 = por %p54, %p55
      %p58 = scmp.ne.s32.totalorder %s41, %s57
      %p59 = scmp.eq.s32.totalorder %s19, 0
      %p60 = por %p58, %p59
      %s62 = sadd.s32 %s61, 1
      %p65 = scmp.eq.s32.totalorder %s13, 1
      %p66 = scmp.ne.s32.totalorder %s61, %s63
      %p67 = scmp.eq.s32.totalorder %s13, 0
      %p68 = por %p66, %p67
      %p69 = scmp.ne.s32.totalorder %s61, %s63
      %p70 = scmp.eq.s32.totalorder %s18, 1
      %p71 = por %p69, %p70
      %p72 = scmp.ne.s32.totalorder %s63, %s64
      %p73 = scmp.eq.s32.totalorder %s18, 0
      %p74 = por %p72, %p73
      %p75 = scmp.ne.s32.totalorder %s63, %s64
      %p76 = scmp.eq.s32.totalorder %s19, 1
      %p77 = por %p75, %p76
      %p79 = scmp.ne.s32.totalorder %s64, %s78
      %p80 = scmp.eq.s32.totalorder %s19, 0
      %p81 = por %p79, %p80
      %s83 = sadd.s32 %s82, 1
      %p86 = scmp.eq.s32.totalorder %s13, 1
      %p87 = scmp.ne.s32.totalorder %s82, %s84
      %p88 = scmp.eq.s32.totalorder %s13, 0
      %p89 = por %p87, %p88
      %p90 = scmp.ne.s32.totalorder %s82, %s84
      %p91 = scmp.eq.s32.totalorder %s18, 1
      %p92 = por %p90, %p91
      %p93 = scmp.ne.s32.totalorder %s84, %s85
      %p94 = scmp.eq.s32.totalorder %s18, 0
      %p95 = por %p93, %p94
      %p96 = scmp.ne.s32.totalorder %s84, %s85
      %p97 = scmp.eq.s32.totalorder %s19, 1
      %p98 = por %p96, %p97
      %p100 = scmp.ne.s32.totalorder %s85, %s99
      %p101 = scmp.eq.s32.totalorder %s19, 0
      %p102 = por %p100, %p101
      %s104 = sadd.s32 %s103, 1
      %p107 = scmp.eq.s32.totalorder %s13, 1
      %p108 = scmp.ne.s32.totalorder %s103, %s105
      %p109 = scmp.eq.s32.totalorder %s13, 0
      %p110 = por %p108, %p109
      %p111 = scmp.ne.s32.totalorder %s103, %s105
      %p112 = scmp.eq.s32.totalorder %s18, 1
      %p113 = por %p111, %p112
      %p114 = scmp.ne.s32.totalorder %s105, %s106
      %p115 = scmp.eq.s32.totalorder %s18, 0
      %p116 = por %p114, %p115
      %p117 = scmp.ne.s32.totalorder %s105, %s106
      %p118 = scmp.eq.s32.totalorder %s19, 1
      %p119 = por %p117, %p118
      %p121 = scmp.ne.s32.totalorder %s106, %s120
      %p122 = scmp.eq.s32.totalorder %s19, 0
      %p123 = por %p121, %p122
      %s124 = ssub.s32 %s20, %s32
      %s125 = ssub.s32 %s21, %s28
      %s126 = sor.u32 %s124, %s125
      %p127 = scmp.eq.s32.totalorder %s126, 0
      %s129 = sadd.s32 %s128, 1
      %s130 = scalar_select %p127, %s128, %s129
      %p133 = pneg %p127
      %p134 = scmp.eq.s32.totalorder %s13, 1
      %p135 = por %p133, %p134
      %p136 = scmp.ne.s32.totalorder %s128, %s131
      %p137 = scmp.eq.s32.totalorder %s13, 0
      %p138 = por %p136, %p137
      %p139 = scmp.ne.s32.totalorder %s128, %s131
      %p140 = scmp.eq.s32.totalorder %s18, 1
      %p141 = por %p139, %p140
      %p142 = scmp.ne.s32.totalorder %s131, %s132
      %p143 = scmp.eq.s32.totalorder %s18, 0
      %p144 = por %p142, %p143
      %p145 = scmp.ne.s32.totalorder %s131, %s132
      %p146 = scmp.eq.s32.totalorder %s19, 1
      %p147 = por %p145, %p146
      %p149 = scmp.ne.s32.totalorder %s132, %s148
      %p150 = scmp.eq.s32.totalorder %s19, 0
      %p151 = por %p149, %p150
      %p152 = scmp.le.s32.totalorder 1, %s13
      %p153 = scmp.lt.s32.totalorder %s13, 3
      %p154 = pnand %p152, %p153
      %p155 = pneg %p154
      // Predicated region
      $region9: #{double_conv_encoder_forward.3} parent=5 // pred_check
        _
      $region10: #{double_conv_encoder_forward.3} parent=5 // pred_check_branch
        %157 = sbr.rel (%p154) target = $region12
      $region11: #{double_conv_encoder_forward.3} parent=5 // pred_region
        %s158 = ssub.s32 %s13, 1
        // Predicated region
        $region13: #{double_conv_encoder_forward.3} parent=11 // pred_check
          %p159 = pneg %p74
        $region14: #{double_conv_encoder_forward.3} parent=11 // pred_check_branch
          %161 = sbr.rel (%p159) target = $region16
        $region15: #{double_conv_encoder_forward.3} parent=11 // pred_region
          _
        $region16: #{double_conv_encoder_forward.3} parent=11 // pred_fallthru
          _
        // Predicated region
        $region17: #{double_conv_encoder_forward.3} parent=11 // pred_check
          %p162 = pneg %p95
        $region18: #{double_conv_encoder_forward.3} parent=11 // pred_check_branch
          %164 = sbr.rel (%p162) target = $region20
        $region19: #{double_conv_encoder_forward.3} parent=11 // pred_region
          _
        $region20: #{double_conv_encoder_forward.3} parent=11 // pred_fallthru
          _
        // Predicated region
        $region21: #{double_conv_encoder_forward.3} parent=11 // pred_check
          %p165 = pneg %p116
        $region22: #{double_conv_encoder_forward.3} parent=11 // pred_check_branch
          %167 = sbr.rel (%p165) target = $region24
        $region23: #{double_conv_encoder_forward.3} parent=11 // pred_region
          _
        $region24: #{double_conv_encoder_forward.3} parent=11 // pred_fallthru
          _
      $region12: #{double_conv_encoder_forward.3} parent=5 // pred_fallthru
        _
      %p168 = scmp.lt.s32.totalorder %s13, 2
      // Predicated region
      $region25: #{double_conv_encoder_forward.3} parent=5 // pred_check
        %p169 = pneg %p168
      $region26: #{double_conv_encoder_forward.3} parent=5 // pred_check_branch
        %171 = sbr.rel (%p169) target = $region28
      $region27: #{double_conv_encoder_forward.3} parent=5 // pred_region
        // Predicated region
        $region29: #{double_conv_encoder_forward.3} parent=27 // pred_check
          %p172 = pneg %p47
        $region30: #{double_conv_encoder_forward.3} parent=27 // pred_check_branch
          %174 = sbr.rel (%p172) target = $region32
        $region31: #{double_conv_encoder_forward.3} parent=27 // pred_region
          %s175 = smul.u32 32, %s21
          %p176 = scmp.lt.s32.totalorder %s20, 1
          %s177 = scalar_select %p176, %s20, 1
          %p178 = scmp.lt.s32.totalorder %s175, 31
          %s179 = scalar_select %p178, %s175, 31
          %s180 = smul.addr %s179, 3
          %s181 = smul.addr %s177, 96
          %s182 = sadd.s32 %s180, %s181
          %s183 = smul.addr %s182, 4
          %s184 = scalar_lea.vmem %s0, %s183
          %s185 = smul.u32 32, %s21
        $region32: #{double_conv_encoder_forward.3} parent=27 // pred_fallthru
          _
      $region28: #{double_conv_encoder_forward.3} parent=5 // pred_fallthru
        _
      %p186 = scmp.le.s32.totalorder 1, %s13
      %p187 = scmp.lt.s32.totalorder %s13, 3
      %p188 = pnand %p186, %p187
      %p189 = pneg %p188
      // Predicated region
      $region33: #{double_conv_encoder_forward.3} parent=5 // pred_check
        _
      $region34: #{double_conv_encoder_forward.3} parent=5 // pred_check_branch
        %191 = sbr.rel (%p188) target = $region36
      $region35: #{double_conv_encoder_forward.3} parent=5 // pred_region
        %s192 = ssub.s32 %s13, 1
        %s193 = smul.u32 32, %s23
        %p194 = scmp.lt.s32.totalorder %s22, 1
        %s195 = scalar_select %p194, %s22, 1
        %p196 = scmp.lt.s32.totalorder %s193, 31
        %s197 = scalar_select %p196, %s193, 31
        %s198 = smul.addr %s197, 3
        %s199 = smul.addr %s195, 96
        %s200 = sadd.s32 %s198, %s199
        %s201 = smul.addr %s200, 4
        %s202 = scalar_lea.vmem %s0, %s201
        %p203 = pneg %p53
        %p204 = pneg %p50
        %p205 = pneg %p74
        %p206 = pneg %p71
        %p207 = pneg %p95
        %p208 = pneg %p92
        %p209 = pneg %p116
        %p210 = pneg %p113
        %p211 = pneg %p144
        %p212 = pneg %p141
        %s213 = sand.u32 %s131, 1
        %s214 = scalar_lea.sflag [#allocation3], %s213
        %s215 = sand.u32 %s131, 1
        %s216 = smul.addr %s215, 256
        %s217 = scalar_lea.vmem [#allocation2], %s216
        %s218 = smul.u32 32, %s23
        %p219 = scmp.lt.s32.totalorder %s22, 1
        %s220 = scalar_select %p219, %s22, 1
        %p221 = scmp.lt.s32.totalorder %s218, 31
        %s222 = scalar_select %p221, %s218, 31
        %s223 = smul.addr %s222, 3
        %s224 = smul.addr %s220, 96
        %s225 = sadd.s32 %s223, %s224
        %s226 = smul.addr %s225, 4
        %s227 = scalar_lea.vmem %s0, %s226
        %s228 = smul.u32 32, %s23
        %s229 = smul.u32 32, %s23
        %v231 = vld [vmem:[%s227] sm:$0xff]
        %v232 = vld [vmem:[%s227 + $0x8] sm:$0xf]
        %v233 = vld [vmem:[%s227 + $0xc] sm:$0xff]
        %v234 = vld [vmem:[%s227 + $0x14] sm:$0xf]
        %v235 = vld [vmem:[%s227 + $0x18] sm:$0xff]
        %v236 = vld [vmem:[%s227 + $0x20] sm:$0xf]
        %v237 = vld [vmem:[%s227 + $0x24] sm:$0xff]
        %v238 = vld [vmem:[%s227 + $0x2c] sm:$0xf]
        %v239 = vld [vmem:[%s227 + $0x30] sm:$0xff]
        %v240 = vld [vmem:[%s227 + $0x38] sm:$0xf]
        %v241 = vld [vmem:[%s227 + $0x3c] sm:$0xff]
        %v242 = vld [vmem:[%s227 + $0x44] sm:$0xf]
        %v243 = vld [vmem:[%s227 + $0x48] sm:$0xff]
        %v244 = vld [vmem:[%s227 + $0x50] sm:$0xf]
        %v245 = vld [vmem:[%s227 + $0x54] sm:$0xff]
        %v246 = vld [vmem:[%s227 + $0x5c] sm:$0xf]
        %v247 = vld [vmem:[%s227 + $0x60] sm:$0xff]
        %v248 = vld [vmem:[%s227 + $0x68] sm:$0xf]
        %v249 = vld [vmem:[%s227 + $0x6c] sm:$0xff]
        %v250 = vld [vmem:[%s227 + $0x74] sm:$0xf]
        %v251 = vld [vmem:[%s227 + $0x78] sm:$0xff]
        %v252 = vld [vmem:[%s227 + $0x80] sm:$0xf]
        %v253 = vld [vmem:[%s227 + $0x84] sm:$0xff]
        %v254 = vld [vmem:[%s227 + $0x8c] sm:$0xf]
        %v255 = vld [vmem:[%s227 + $0x90] sm:$0xff]
        %v256 = vld [vmem:[%s227 + $0x98] sm:$0xf]
        %v257 = vld [vmem:[%s227 + $0x9c] sm:$0xff]
        %v258 = vld [vmem:[%s227 + $0xa4] sm:$0xf]
        %v259 = vld [vmem:[%s227 + $0xa8] sm:$0xff]
        %v260 = vld [vmem:[%s227 + $0xb0] sm:$0xf]
        %v261 = vld [vmem:[%s227 + $0xb4] sm:$0xff]
        %v262 = vld [vmem:[%s227 + $0xbc] sm:$0xf]
        %v263 = vld [vmem:[%s227 + $0xc0] sm:$0xff]
        %v264 = vld [vmem:[%s227 + $0xc8] sm:$0xf]
        %v265 = vld [vmem:[%s227 + $0xcc] sm:$0xff]
        %v266 = vld [vmem:[%s227 + $0xd4] sm:$0xf]
        %v267 = vld [vmem:[%s227 + $0xd8] sm:$0xff]
        %v268 = vld [vmem:[%s227 + $0xe0] sm:$0xf]
        %v269 = vld [vmem:[%s227 + $0xe4] sm:$0xff]
        %v270 = vld [vmem:[%s227 + $0xec] sm:$0xf]
        %v271 = vld [vmem:[%s227 + $0xf0] sm:$0xff]
        %v272 = vld [vmem:[%s227 + $0xf8] sm:$0xf]
        %v273 = vld [vmem:[%s227 + $0xfc] sm:$0xff]
        %v274 = vld [vmem:[%s227 + $0x104] sm:$0xf]
        %v275 = vld [vmem:[%s227 + $0x108] sm:$0xff]
        %v276 = vld [vmem:[%s227 + $0x110] sm:$0xf]
        %v277 = vld [vmem:[%s227 + $0x114] sm:$0xff]
        %v278 = vld [vmem:[%s227 + $0x11c] sm:$0xf]
        %v279 = vld [vmem:[%s227 + $0x120] sm:$0xff]
        %v280 = vld [vmem:[%s227 + $0x128] sm:$0xf]
        %v281 = vld [vmem:[%s227 + $0x12c] sm:$0xff]
        %v282 = vld [vmem:[%s227 + $0x134] sm:$0xf]
        %v283 = vld [vmem:[%s227 + $0x138] sm:$0xff]
        %v284 = vld [vmem:[%s227 + $0x140] sm:$0xf]
        %v285 = vld [vmem:[%s227 + $0x144] sm:$0xff]
        %v286 = vld [vmem:[%s227 + $0x14c] sm:$0xf]
        %v287 = vld [vmem:[%s227 + $0x150] sm:$0xff]
        %v288 = vld [vmem:[%s227 + $0x158] sm:$0xf]
        %v289 = vld [vmem:[%s227 + $0x15c] sm:$0xff]
        %v290 = vld [vmem:[%s227 + $0x164] sm:$0xf]
        %v291 = vld [vmem:[%s227 + $0x168] sm:$0xff]
        %v292 = vld [vmem:[%s227 + $0x170] sm:$0xf]
        %v293 = vld [vmem:[%s227 + $0x174] sm:$0xff]
        %v294 = vld [vmem:[%s227 + $0x17c] sm:$0xf]
        %v295 = vld [vmem:[%s1] sm:$0xf]
        %v296 = vld [vmem:[%s1 + $0x4] sm:$0xf]
        %v297 = vld [vmem:[%s1 + $0x8] sm:$0xf]
        %v298 = vld [vmem:[%s1 + $0xc] sm:$0xf]
        %v299 = vld [vmem:[%s1 + $0x10] sm:$0xf]
        %v300 = vld [vmem:[%s1 + $0x14] sm:$0xf]
        %v301 = vld [vmem:[%s1 + $0x18] sm:$0xf]
        %v302 = vld [vmem:[%s1 + $0x1c] sm:$0xf]
        %v303 = vld [vmem:[%s1 + $0x20] sm:$0xf]
        %v304 = vld [vmem:[%s1 + $0x24] sm:$0xf]
        %v305 = vld [vmem:[%s1 + $0x28] sm:$0xf]
        %v306 = vld [vmem:[%s1 + $0x2c] sm:$0xf]
        %v307 = vld [vmem:[%s1 + $0x30] sm:$0xf]
        %v308 = vld [vmem:[%s1 + $0x34] sm:$0xf]
        %v309 = vld [vmem:[%s1 + $0x38] sm:$0xf]
        %v310 = vld [vmem:[%s1 + $0x3c] sm:$0xf]
        %v311 = vld [vmem:[%s1 + $0x40] sm:$0xf]
        %v312 = vld [vmem:[%s1 + $0x44] sm:$0xf]
        %v313 = vld [vmem:[%s1 + $0x48] sm:$0xf]
        %v314 = vld [vmem:[%s1 + $0x4c] sm:$0xf]
        %v315 = vld [vmem:[%s1 + $0x50] sm:$0xf]
        %v316 = vld [vmem:[%s1 + $0x54] sm:$0xf]
        %v317 = vld [vmem:[%s1 + $0x58] sm:$0xf]
        %v318 = vld [vmem:[%s1 + $0x5c] sm:$0xf]
        %v319 = vld [vmem:[%s1 + $0x60] sm:$0xf]
        %v320 = vld [vmem:[%s1 + $0x64] sm:$0xf]
        %v321 = vld [vmem:[%s1 + $0x68] sm:$0xf]
        %v322 = vld [vmem:[%s1 + $0x6c] sm:$0xf]
        %v323 = vld [vmem:[%s1 + $0x70] sm:$0xf]
        %v324 = vld [vmem:[%s1 + $0x74] sm:$0xf]
        %v325 = vld [vmem:[%s1 + $0x78] sm:$0xf]
        %v326 = vld [vmem:[%s1 + $0x7c] sm:$0xf]
        %v327 = vld [vmem:[%s1 + $0x80] sm:$0xf]
        %v328 = vld [vmem:[%s1 + $0x84] sm:$0xf]
        %v329 = vld [vmem:[%s1 + $0x88] sm:$0xf]
        %v330 = vld [vmem:[%s1 + $0x8c] sm:$0xf]
        %v395 = vunpack.c.l.b16 %v231
        %v396 = vunpack.c.h.b16 %v231
        %v397 = vunpack.c.l.b16 %v232
        %v398 = vunpack.c.l.b16 %v233
        %v399 = vunpack.c.h.b16 %v233
        %v400 = vunpack.c.l.b16 %v234
        %v401 = vunpack.c.l.b16 %v235
        %v402 = vunpack.c.h.b16 %v235
        %v403 = vunpack.c.l.b16 %v236
        %v404 = vunpack.c.l.b16 %v237
        %v405 = vunpack.c.h.b16 %v237
        %v406 = vunpack.c.l.b16 %v238
        %v407 = vunpack.c.l.b16 %v239
        %v408 = vunpack.c.h.b16 %v239
        %v409 = vunpack.c.l.b16 %v240
        %v410 = vunpack.c.l.b16 %v241
        %v411 = vunpack.c.h.b16 %v241
        %v412 = vunpack.c.l.b16 %v242
        %v413 = vunpack.c.l.b16 %v243
        %v414 = vunpack.c.h.b16 %v243
        %v415 = vunpack.c.l.b16 %v244
        %v416 = vunpack.c.l.b16 %v245
        %v417 = vunpack.c.h.b16 %v245
        %v418 = vunpack.c.l.b16 %v246
        %v419 = vunpack.c.l.b16 %v247
        %v420 = vunpack.c.h.b16 %v247
        %v421 = vunpack.c.l.b16 %v248
        %v422 = vunpack.c.l.b16 %v249
        %v423 = vunpack.c.h.b16 %v249
        %v424 = vunpack.c.l.b16 %v250
        %v425 = vunpack.c.l.b16 %v251
        %v426 = vunpack.c.h.b16 %v251
        %v427 = vunpack.c.l.b16 %v252
        %v428 = vunpack.c.l.b16 %v253
        %v429 = vunpack.c.h.b16 %v253
        %v430 = vunpack.c.l.b16 %v254
        %v431 = vunpack.c.l.b16 %v255
        %v432 = vunpack.c.h.b16 %v255
        %v433 = vunpack.c.l.b16 %v256
        %v434 = vunpack.c.l.b16 %v257
        %v435 = vunpack.c.h.b16 %v257
        %v436 = vunpack.c.l.b16 %v258
        %v437 = vunpack.c.l.b16 %v259
        %v438 = vunpack.c.h.b16 %v259
        %v439 = vunpack.c.l.b16 %v260
        %v440 = vunpack.c.l.b16 %v261
        %v441 = vunpack.c.h.b16 %v261
        %v442 = vunpack.c.l.b16 %v262
        %v443 = vunpack.c.l.b16 %v263
        %v444 = vunpack.c.h.b16 %v263
        %v445 = vunpack.c.l.b16 %v264
        %v446 = vunpack.c.l.b16 %v265
        %v447 = vunpack.c.h.b16 %v265
        %v448 = vunpack.c.l.b16 %v266
        %v449 = vunpack.c.l.b16 %v267
        %v450 = vunpack.c.h.b16 %v267
        %v451 = vunpack.c.l.b16 %v268
        %v452 = vunpack.c.l.b16 %v269
        %v453 = vunpack.c.h.b16 %v269
        %v454 = vunpack.c.l.b16 %v270
        %v455 = vunpack.c.l.b16 %v271
        %v456 = vunpack.c.h.b16 %v271
        %v457 = vunpack.c.l.b16 %v272
        %v458 = vunpack.c.l.b16 %v273
        %v459 = vunpack.c.h.b16 %v273
        %v460 = vunpack.c.l.b16 %v274
        %v461 = vunpack.c.l.b16 %v275
        %v462 = vunpack.c.h.b16 %v275
        %v463 = vunpack.c.l.b16 %v276
        %v464 = vunpack.c.l.b16 %v277
        %v465 = vunpack.c.h.b16 %v277
        %v466 = vunpack.c.l.b16 %v278
        %v467 = vunpack.c.l.b16 %v279
        %v468 = vunpack.c.h.b16 %v279
        %v469 = vunpack.c.l.b16 %v280
        %v470 = vunpack.c.l.b16 %v281
        %v471 = vunpack.c.h.b16 %v281
        %v472 = vunpack.c.l.b16 %v282
        %v473 = vunpack.c.l.b16 %v283
        %v474 = vunpack.c.h.b16 %v283
        %v475 = vunpack.c.l.b16 %v284
        %v476 = vunpack.c.l.b16 %v285
        %v477 = vunpack.c.h.b16 %v285
        %v478 = vunpack.c.l.b16 %v286
        %v479 = vunpack.c.l.b16 %v287
        %v480 = vunpack.c.h.b16 %v287
        %v481 = vunpack.c.l.b16 %v288
        %v482 = vunpack.c.l.b16 %v289
        %v483 = vunpack.c.h.b16 %v289
        %v484 = vunpack.c.l.b16 %v290
        %v485 = vunpack.c.l.b16 %v291
        %v486 = vunpack.c.h.b16 %v291
        %v487 = vunpack.c.l.b16 %v292
        %v488 = vunpack.c.l.b16 %v293
        %v489 = vunpack.c.h.b16 %v293
        %v490 = vunpack.c.l.b16 %v294
        %v491 = vpack.c.b16 %v398, %v395
        %v492 = vpack.c.b16 %v399, %v396
        %v493 = vpack.c.b16 %v400, %v397
        %v494 = vpack.c.b16 %v404, %v401
        %v495 = vpack.c.b16 %v405, %v402
        %v496 = vpack.c.b16 %v406, %v403
        %v497 = vpack.c.b16 %v410, %v407
        %v498 = vpack.c.b16 %v411, %v408
        %v499 = vpack.c.b16 %v412, %v409
        %v500 = vpack.c.b16 %v416, %v413
        %v501 = vpack.c.b16 %v417, %v414
        %v502 = vpack.c.b16 %v418, %v415
        %v503 = vpack.c.b16 %v422, %v419
        %v504 = vpack.c.b16 %v423, %v420
        %v505 = vpack.c.b16 %v424, %v421
        %v506 = vpack.c.b16 %v428, %v425
        %v507 = vpack.c.b16 %v429, %v426
        %v508 = vpack.c.b16 %v430, %v427
        %v509 = vpack.c.b16 %v434, %v431
        %v510 = vpack.c.b16 %v435, %v432
        %v511 = vpack.c.b16 %v436, %v433
        %v512 = vpack.c.b16 %v440, %v437
        %v513 = vpack.c.b16 %v441, %v438
        %v514 = vpack.c.b16 %v442, %v439
        %v515 = vpack.c.b16 %v446, %v443
        %v516 = vpack.c.b16 %v447, %v444
        %v517 = vpack.c.b16 %v448, %v445
        %v518 = vpack.c.b16 %v452, %v449
        %v519 = vpack.c.b16 %v453, %v450
        %v520 = vpack.c.b16 %v454, %v451
        %v521 = vpack.c.b16 %v458, %v455
        %v522 = vpack.c.b16 %v459, %v456
        %v523 = vpack.c.b16 %v460, %v457
        %v524 = vpack.c.b16 %v464, %v461
        %v525 = vpack.c.b16 %v465, %v462
        %v526 = vpack.c.b16 %v466, %v463
        %v527 = vpack.c.b16 %v470, %v467
        %v528 = vpack.c.b16 %v471, %v468
        %v529 = vpack.c.b16 %v472, %v469
        %v530 = vpack.c.b16 %v476, %v473
        %v531 = vpack.c.b16 %v477, %v474
        %v532 = vpack.c.b16 %v478, %v475
        %v533 = vpack.c.b16 %v482, %v479
        %v534 = vpack.c.b16 %v483, %v480
        %v535 = vpack.c.b16 %v484, %v481
        %v536 = vpack.c.b16 %v488, %v485
        %v537 = vpack.c.b16 %v489, %v486
        %v538 = vpack.c.b16 %v490, %v487
        %v607 = vunpack.c.l.b16 %v295
        %v608 = vunpack.c.l.b16 %v296
        %v609 = vunpack.c.l.b16 %v297
        %v610 = vunpack.c.l.b16 %v298
        %v611 = vunpack.c.l.b16 %v299
        %v612 = vunpack.c.l.b16 %v300
        %v613 = vunpack.c.l.b16 %v301
        %v614 = vunpack.c.l.b16 %v302
        %v615 = vunpack.c.l.b16 %v303
        %v616 = vunpack.c.l.b16 %v304
        %v617 = vunpack.c.l.b16 %v305
        %v618 = vunpack.c.l.b16 %v306
        %v619 = vunpack.c.l.b16 %v307
        %v620 = vunpack.c.l.b16 %v308
        %v621 = vunpack.c.l.b16 %v309
        %v622 = vunpack.c.l.b16 %v310
        %v623 = vunpack.c.l.b16 %v311
        %v624 = vunpack.c.l.b16 %v312
        %v625 = vunpack.c.l.b16 %v313
        %v626 = vunpack.c.l.b16 %v314
        %v627 = vunpack.c.l.b16 %v315
        %v628 = vunpack.c.l.b16 %v316
        %v629 = vunpack.c.l.b16 %v317
        %v630 = vunpack.c.l.b16 %v318
        %v631 = vunpack.c.l.b16 %v319
        %v632 = vunpack.c.l.b16 %v320
        %v633 = vunpack.c.l.b16 %v321
        %v634 = vunpack.c.l.b16 %v322
        %v635 = vunpack.c.l.b16 %v323
        %v636 = vunpack.c.l.b16 %v324
        %v637 = vunpack.c.l.b16 %v325
        %v638 = vunpack.c.l.b16 %v326
        %v639 = vunpack.c.l.b16 %v327
        %v640 = vunpack.c.l.b16 %v328
        %v641 = vunpack.c.l.b16 %v329
        %v642 = vunpack.c.l.b16 %v330
        %v643 = vpack.c.b16 %v608, %v607
        %v644 = vpack.c.b16 %v610, %v609
        %v645 = vpack.c.b16 %v612, %v611
        %v646 = vpack.c.b16 %v614, %v613
        %v647 = vpack.c.b16 %v616, %v615
        %v648 = vpack.c.b16 %v618, %v617
        %v649 = vpack.c.b16 %v620, %v619
        %v650 = vpack.c.b16 %v622, %v621
        %v651 = vpack.c.b16 %v624, %v623
        %v652 = vpack.c.b16 %v626, %v625
        %v653 = vpack.c.b16 %v628, %v627
        %v654 = vpack.c.b16 %v630, %v629
        %v655 = vpack.c.b16 %v632, %v631
        %v656 = vpack.c.b16 %v634, %v633
        %v657 = vpack.c.b16 %v636, %v635
        %v658 = vpack.c.b16 %v638, %v637
        %v659 = vpack.c.b16 %v640, %v639
        %v660 = vpack.c.b16 %v642, %v641
        %vm679 = vcmask 261120
        %v681 = vsel %vm679, %v493, 0
        %v684 = vsel %vm679, %v496, 0
        %v687 = vsel %vm679, %v499, 0
        %v690 = vsel %vm679, %v502, 0
        %v693 = vsel %vm679, %v505, 0
        %v696 = vsel %vm679, %v508, 0
        %v699 = vsel %vm679, %v511, 0
        %v702 = vsel %vm679, %v514, 0
        %v705 = vsel %vm679, %v517, 0
        %v708 = vsel %vm679, %v520, 0
        %v711 = vsel %vm679, %v523, 0
        %v714 = vsel %vm679, %v526, 0
        %v717 = vsel %vm679, %v529, 0
        %v720 = vsel %vm679, %v532, 0
        %v723 = vsel %vm679, %v535, 0
        %v726 = vsel %vm679, %v538, 0
        %728 = vmatprep.subr.bf16.mxu0 0
        %729 = vmatpush1.bf16.msra.mxu0 %v643
        %730 = vmatprep.subr.bf16.mxu0 0
        %731 = vmatpush1.bf16.msra.mxu0 %v644
        %732 = vmatprep.subr.bf16.mxu0 0
        %733 = vmatpush1.bf16.msra.mxu0 %v645
        %734 = vmatprep.subr.bf16.mxu0 0
        %735 = vmatpush1.bf16.msra.mxu0 %v646
        %736 = vmatprep.subr.bf16.mxu0 0
        %737 = vmatpush1.bf16.msra.mxu0 %v647
        %738 = vmatprep.subr.bf16.mxu0 0
        %739 = vmatpush1.bf16.msra.mxu0 %v648
        %740 = vmatprep.subr.bf16.mxu0 0
        %741 = vmatpush1.bf16.msra.mxu0 %v649
        %742 = vmatprep.subr.bf16.mxu0 0
        %743 = vmatpush1.bf16.msra.mxu0 %v650
        %744 = vmatprep.subr.bf16.mxu0 0
        %745 = vmatpush1.bf16.msra.mxu0 %v651
        %746 = vmatprep.subr.bf16.mxu0 0
        %747 = vmatpush1.bf16.msra.mxu0 %v652
        %748 = vmatprep.subr.bf16.mxu0 0
        %749 = vmatpush1.bf16.msra.mxu0 %v653
        %750 = vmatprep.subr.bf16.mxu0 0
        %751 = vmatpush1.bf16.msra.mxu0 %v654
        %752 = vmatprep.subr.bf16.mxu0 0
        %753 = vmatpush1.bf16.msra.mxu0 %v655
        %754 = vmatprep.subr.bf16.mxu0 0
        %755 = vmatpush1.bf16.msra.mxu0 %v656
        %756 = vmatprep.subr.bf16.mxu0 0
        %757 = vmatpush1.bf16.msra.mxu0 %v657
        %758 = vmatprep.subr.bf16.mxu0 0
        %759 = vmatpush1.bf16.msra.mxu0 %v658
        %760 = vmatprep.mubr.bf16.mxu0 %v492
        %761 = vmatmul.mubr.bf16.gmra.mrb[0].mxu0 %v491
        %v762 = vpop.f32.mrb[0].mxu0
        %v763 = vadd.f32 0.0, %v762
        %v764 = vpop.f32.mrb[0].mxu0
        %v765 = vpop.f32.mrb[0].mxu0
        %v766 = vadd.f32 0.0, %v765
        %v767 = vpop.f32.mrb[0].mxu0
        %768 = vmatprep.mubr.bf16.mxu0 %v495
        %769 = vmatmul.mubr.bf16.gmra.mrb[0].mxu0 %v494
        %v770 = vpop.f32.mrb[0].mxu0
        %v771 = vadd.f32 0.0, %v770
        %v772 = vpop.f32.mrb[0].mxu0
        %v773 = vpop.f32.mrb[0].mxu0
        %v774 = vadd.f32 0.0, %v773
        %v775 = vpop.f32.mrb[0].mxu0
        %776 = vmatprep.mubr.bf16.mxu0 %v498
        %777 = vmatmul.mubr.bf16.gmra.mrb[0].mxu0 %v497
        %v778 = vpop.f32.mrb[0].mxu0
        %v779 = vadd.f32 0.0, %v778
        %v780 = vpop.f32.mrb[0].mxu0
        %v781 = vpop.f32.mrb[0].mxu0
        %v782 = vadd.f32 0.0, %v781
        %v783 = vpop.f32.mrb[0].mxu0
        %784 = vmatprep.mubr.bf16.mxu0 %v501
        %785 = vmatmul.mubr.bf16.gmra.mrb[0].mxu0 %v500
        %v786 = vpop.f32.mrb[0].mxu0
        %v787 = vadd.f32 0.0, %v786
        %v788 = vpop.f32.mrb[0].mxu0
        %v789 = vpop.f32.mrb[0].mxu0
        %v790 = vadd.f32 0.0, %v789
        %v791 = vpop.f32.mrb[0].mxu0
        %792 = vmatprep.mubr.bf16.mxu0 %v504
        %793 = vmatmul.mubr.bf16.gmra.mrb[0].mxu0 %v503
        %v794 = vpop.f32.mrb[0].mxu0
        %v795 = vadd.f32 0.0, %v794
        %v796 = vpop.f32.mrb[0].mxu0
        %v797 = vpop.f32.mrb[0].mxu0
        %v798 = vadd.f32 0.0, %v797
        %v799 = vpop.f32.mrb[0].mxu0
        %800 = vmatprep.mubr.bf16.mxu0 %v507
        %801 = vmatmul.mubr.bf16.gmra.mrb[0].mxu0 %v506
        %v802 = vpop.f32.mrb[0].mxu0
        %v803 = vadd.f32 0.0, %v802
        %v804 = vpop.f32.mrb[0].mxu0
        %v805 = vpop.f32.mrb[0].mxu0
        %v806 = vadd.f32 0.0, %v805
        %v807 = vpop.f32.mrb[0].mxu0
        %808 = vmatprep.mubr.bf16.mxu0 %v510
        %809 = vmatmul.mubr.bf16.gmra.mrb[0].mxu0 %v509
        %v810 = vpop.f32.mrb[0].mxu0
        %v811 = vadd.f32 0.0, %v810
        %v812 = vpop.f32.mrb[0].mxu0
        %v813 = vpop.f32.mrb[0].mxu0
        %v814 = vadd.f32 0.0, %v813
        %v815 = vpop.f32.mrb[0].mxu0
        %816 = vmatprep.mubr.bf16.mxu0 %v513
        %817 = vmatmul.mubr.bf16.gmra.mrb[0].mxu0 %v512
        %v818 = vpop.f32.mrb[0].mxu0
        %v819 = vadd.f32 0.0, %v818
        %v820 = vpop.f32.mrb[0].mxu0
        %v821 = vpop.f32.mrb[0].mxu0
        %v822 = vadd.f32 0.0, %v821
        %v823 = vpop.f32.mrb[0].mxu0
        %824 = vmatprep.mubr.bf16.mxu0 %v516
        %825 = vmatmul.mubr.bf16.gmra.mrb[0].mxu0 %v515
        %v826 = vpop.f32.mrb[0].mxu0
        %v827 = vadd.f32 0.0, %v826
        %v828 = vpop.f32.mrb[0].mxu0
        %v829 = vpop.f32.mrb[0].mxu0
        %v830 = vadd.f32 0.0, %v829
        %v831 = vpop.f32.mrb[0].mxu0
        %832 = vmatprep.mubr.bf16.mxu0 %v519
        %833 = vmatmul.mubr.bf16.gmra.mrb[0].mxu0 %v518
        %v834 = vpop.f32.mrb[0].mxu0
        %v835 = vadd.f32 0.0, %v834
        %v836 = vpop.f32.mrb[0].mxu0
        %v837 = vpop.f32.mrb[0].mxu0
        %v838 = vadd.f32 0.0, %v837
        %v839 = vpop.f32.mrb[0].mxu0
        %840 = vmatprep.mubr.bf16.mxu0 %v522
        %841 = vmatmul.mubr.bf16.gmra.mrb[0].mxu0 %v521
        %v842 = vpop.f32.mrb[0].mxu0
        %v843 = vadd.f32 0.0, %v842
        %v844 = vpop.f32.mrb[0].mxu0
        %v845 = vpop.f32.mrb[0].mxu0
        %v846 = vadd.f32 0.0, %v845
        %v847 = vpop.f32.mrb[0].mxu0
        %848 = vmatprep.mubr.bf16.mxu0 %v525
        %849 = vmatmul.mubr.bf16.gmra.mrb[0].mxu0 %v524
        %v850 = vpop.f32.mrb[0].mxu0
        %v851 = vadd.f32 0.0, %v850
        %v852 = vpop.f32.mrb[0].mxu0
        %v853 = vpop.f32.mrb[0].mxu0
        %v854 = vadd.f32 0.0, %v853
        %v855 = vpop.f32.mrb[0].mxu0
        %856 = vmatprep.mubr.bf16.mxu0 %v528
        %857 = vmatmul.mubr.bf16.gmra.mrb[0].mxu0 %v527
        %v858 = vpop.f32.mrb[0].mxu0
        %v859 = vadd.f32 0.0, %v858
        %v860 = vpop.f32.mrb[0].mxu0
        %v861 = vpop.f32.mrb[0].mxu0
        %v862 = vadd.f32 0.0, %v861
        %v863 = vpop.f32.mrb[0].mxu0
        %864 = vmatprep.mubr.bf16.mxu0 %v531
        %865 = vmatmul.mubr.bf16.gmra.mrb[0].mxu0 %v530
        %v866 = vpop.f32.mrb[0].mxu0
        %v867 = vadd.f32 0.0, %v866
        %v868 = vpop.f32.mrb[0].mxu0
        %v869 = vpop.f32.mrb[0].mxu0
        %v870 = vadd.f32 0.0, %v869
        %v871 = vpop.f32.mrb[0].mxu0
        %872 = vmatprep.mubr.bf16.mxu0 %v534
        %873 = vmatmul.mubr.bf16.gmra.mrb[0].mxu0 %v533
        %v874 = vpop.f32.mrb[0].mxu0
        %v875 = vadd.f32 0.0, %v874
        %v876 = vpop.f32.mrb[0].mxu0
        %v877 = vpop.f32.mrb[0].mxu0
        %v878 = vadd.f32 0.0, %v877
        %v879 = vpop.f32.mrb[0].mxu0
        %880 = vmatprep.mubr.bf16.mxu0 %v537
        %881 = vmatmul.mubr.bf16.gmra.mrb[0].mxu0 %v536
        %v882 = vpop.f32.mrb[0].mxu0
        %v883 = vadd.f32 0.0, %v882
        %v884 = vpop.f32.mrb[0].mxu0
        %v885 = vpop.f32.mrb[0].mxu0
        %v886 = vadd.f32 0.0, %v885
        %v887 = vpop.f32.mrb[0].mxu0
        %888 = vdwg.mxu0
        %889 = vmatprep.subr.bf16.mxu0 0
        %890 = vmatpush1.bf16.msra.mxu0 %v659
        %891 = vmatprep.subr.bf16.mxu0 0
        %892 = vmatpush1.bf16.msra.mxu0 %v660
        %893 = vmatprep.subr.bf16.mxu0 0
        %894 = vmatpush1.bf16.msra.mxu0 0
        %895 = vmatprep.subr.bf16.mxu0 0
        %896 = vmatpush1.bf16.msra.mxu0 0
        %897 = vmatprep.subr.bf16.mxu0 0
        %898 = vmatpush1.bf16.msra.mxu0 0
        %899 = vmatprep.subr.bf16.mxu0 0
        %900 = vmatpush1.bf16.msra.mxu0 0
        %901 = vmatprep.subr.bf16.mxu0 0
        %902 = vmatpush1.bf16.msra.mxu0 0
        %903 = vmatprep.subr.bf16.mxu0 0
        %904 = vmatpush1.bf16.msra.mxu0 0
        %905 = vmatprep.subr.bf16.mxu0 0
        %906 = vmatpush1.bf16.msra.mxu0 0
        %907 = vmatprep.subr.bf16.mxu0 0
        %908 = vmatpush1.bf16.msra.mxu0 0
        %909 = vmatprep.subr.bf16.mxu0 0
        %910 = vmatpush1.bf16.msra.mxu0 0
        %911 = vmatprep.subr.bf16.mxu0 0
        %912 = vmatpush1.bf16.msra.mxu0 0
        %913 = vmatprep.subr.bf16.mxu0 0
        %914 = vmatpush1.bf16.msra.mxu0 0
        %915 = vmatprep.subr.bf16.mxu0 0
        %916 = vmatpush1.bf16.msra.mxu0 0
        %917 = vmatprep.subr.bf16.mxu0 0
        %918 = vmatpush1.bf16.msra.mxu0 0
        %919 = vmatprep.subr.bf16.mxu0 0
        %920 = vmatpush1.bf16.msra.mxu0 0
        %921 = vmatprep.mubr.bf16.mxu0 0
        %922 = vmatmul.mubr.bf16.gmra.mrb[0].mxu0 %v681
        %v923 = vpop.f32.mrb[0].mxu0
        %v924 = vadd.f32 %v763, %v923
        %v925 = vpop.f32.mrb[0].mxu0
        %v926 = vpop.f32.mrb[0].mxu0
        %v927 = vadd.f32 %v766, %v926
        %v928 = vpop.f32.mrb[0].mxu0
        %929 = vmatprep.mubr.bf16.mxu0 0
        %930 = vmatmul.mubr.bf16.gmra.mrb[0].mxu0 %v684
        %v931 = vpop.f32.mrb[0].mxu0
        %v932 = vadd.f32 %v771, %v931
        %v933 = vpop.f32.mrb[0].mxu0
        %v934 = vpop.f32.mrb[0].mxu0
        %v935 = vadd.f32 %v774, %v934
        %v936 = vpop.f32.mrb[0].mxu0
        %937 = vmatprep.mubr.bf16.mxu0 0
        %938 = vmatmul.mubr.bf16.gmra.mrb[0].mxu0 %v687
        %v939 = vpop.f32.mrb[0].mxu0
        %v940 = vadd.f32 %v779, %v939
        %v941 = vpop.f32.mrb[0].mxu0
        %v942 = vpop.f32.mrb[0].mxu0
        %v943 = vadd.f32 %v782, %v942
        %v944 = vpop.f32.mrb[0].mxu0
        %945 = vmatprep.mubr.bf16.mxu0 0
        %946 = vmatmul.mubr.bf16.gmra.mrb[0].mxu0 %v690
        %v947 = vpop.f32.mrb[0].mxu0
        %v948 = vadd.f32 %v787, %v947
        %v949 = vpop.f32.mrb[0].mxu0
        %v950 = vpop.f32.mrb[0].mxu0
        %v951 = vadd.f32 %v790, %v950
        %v952 = vpop.f32.mrb[0].mxu0
        %953 = vmatprep.mubr.bf16.mxu0 0
        %954 = vmatmul.mubr.bf16.gmra.mrb[0].mxu0 %v693
        %v955 = vpop.f32.mrb[0].mxu0
        %v956 = vadd.f32 %v795, %v955
        %v957 = vpop.f32.mrb[0].mxu0
        %v958 = vpop.f32.mrb[0].mxu0
        %v959 = vadd.f32 %v798, %v958
        %v960 = vpop.f32.mrb[0].mxu0
        %961 = vmatprep.mubr.bf16.mxu0 0
        %962 = vmatmul.mubr.bf16.gmra.mrb[0].mxu0 %v696
        %v963 = vpop.f32.mrb[0].mxu0
        %v964 = vadd.f32 %v803, %v963
        %v965 = vpop.f32.mrb[0].mxu0
        %v966 = vpop.f32.mrb[0].mxu0
        %v967 = vadd.f32 %v806, %v966
        %v968 = vpop.f32.mrb[0].mxu0
        %969 = vmatprep.mubr.bf16.mxu0 0
        %970 = vmatmul.mubr.bf16.gmra.mrb[0].mxu0 %v699
        %v971 = vpop.f32.mrb[0].mxu0
        %v972 = vadd.f32 %v811, %v971
        %v973 = vpop.f32.mrb[0].mxu0
        %v974 = vpop.f32.mrb[0].mxu0
        %v975 = vadd.f32 %v814, %v974
        %v976 = vpop.f32.mrb[0].mxu0
        %977 = vmatprep.mubr.bf16.mxu0 0
        %978 = vmatmul.mubr.bf16.gmra.mrb[0].mxu0 %v702
        %v979 = vpop.f32.mrb[0].mxu0
        %v980 = vadd.f32 %v819, %v979
        %v981 = vpop.f32.mrb[0].mxu0
        %v982 = vpop.f32.mrb[0].mxu0
        %v983 = vadd.f32 %v822, %v982
        %v984 = vpop.f32.mrb[0].mxu0
        %985 = vmatprep.mubr.bf16.mxu0 0
        %986 = vmatmul.mubr.bf16.gmra.mrb[0].mxu0 %v705
        %v987 = vpop.f32.mrb[0].mxu0
        %v988 = vadd.f32 %v827, %v987
        %v989 = vpop.f32.mrb[0].mxu0
        %v990 = vpop.f32.mrb[0].mxu0
        %v991 = vadd.f32 %v830, %v990
        %v992 = vpop.f32.mrb[0].mxu0
        %993 = vmatprep.mubr.bf16.mxu0 0
        %994 = vmatmul.mubr.bf16.gmra.mrb[0].mxu0 %v708
        %v995 = vpop.f32.mrb[0].mxu0
        %v996 = vadd.f32 %v835, %v995
        %v997 = vpop.f32.mrb[0].mxu0
        %v998 = vpop.f32.mrb[0].mxu0
        %v999 = vadd.f32 %v838, %v998
        %v1000 = vpop.f32.mrb[0].mxu0
        %1001 = vmatprep.mubr.bf16.mxu0 0
        %1002 = vmatmul.mubr.bf16.gmra.mrb[0].mxu0 %v711
        %v1003 = vpop.f32.mrb[0].mxu0
        %v1004 = vadd.f32 %v843, %v1003
        %v1005 = vpop.f32.mrb[0].mxu0
        %v1006 = vpop.f32.mrb[0].mxu0
        %v1007 = vadd.f32 %v846, %v1006
        %v1008 = vpop.f32.mrb[0].mxu0
        %1009 = vmatprep.mubr.bf16.mxu0 0
        %1010 = vmatmul.mubr.bf16.gmra.mrb[0].mxu0 %v714
        %v1011 = vpop.f32.mrb[0].mxu0
        %v1012 = vadd.f32 %v851, %v1011
        %v1013 = vpop.f32.mrb[0].mxu0
        %v1014 = vpop.f32.mrb[0].mxu0
        %v1015 = vadd.f32 %v854, %v1014
        %v1016 = vpop.f32.mrb[0].mxu0
        %1017 = vmatprep.mubr.bf16.mxu0 0
        %1018 = vmatmul.mubr.bf16.gmra.mrb[0].mxu0 %v717
        %v1019 = vpop.f32.mrb[0].mxu0
        %v1020 = vadd.f32 %v859, %v1019
        %v1021 = vpop.f32.mrb[0].mxu0
        %v1022 = vpop.f32.mrb[0].mxu0
        %v1023 = vadd.f32 %v862, %v1022
        %v1024 = vpop.f32.mrb[0].mxu0
        %1025 = vmatprep.mubr.bf16.mxu0 0
        %1026 = vmatmul.mubr.bf16.gmra.mrb[0].mxu0 %v720
        %v1027 = vpop.f32.mrb[0].mxu0
        %v1028 = vadd.f32 %v867, %v1027
        %v1029 = vpop.f32.mrb[0].mxu0
        %v1030 = vpop.f32.mrb[0].mxu0
        %v1031 = vadd.f32 %v870, %v1030
        %v1032 = vpop.f32.mrb[0].mxu0
        %1033 = vmatprep.mubr.bf16.mxu0 0
        %1034 = vmatmul.mubr.bf16.gmra.mrb[0].mxu0 %v723
        %v1035 = vpop.f32.mrb[0].mxu0
        %v1036 = vadd.f32 %v875, %v1035
        %v1037 = vpop.f32.mrb[0].mxu0
        %v1038 = vpop.f32.mrb[0].mxu0
        %v1039 = vadd.f32 %v878, %v1038
        %v1040 = vpop.f32.mrb[0].mxu0
        %1041 = vmatprep.mubr.bf16.mxu0 0
        %1042 = vmatmul.mubr.bf16.gmra.mrb[0].mxu0 %v726
        %v1043 = vpop.f32.mrb[0].mxu0
        %v1044 = vadd.f32 %v883, %v1043
        %v1045 = vpop.f32.mrb[0].mxu0
        %v1046 = vpop.f32.mrb[0].mxu0
        %v1047 = vadd.f32 %v886, %v1046
        %v1048 = vpop.f32.mrb[0].mxu0
        %1049 = vdwg.mxu0
        %v1050 = vld [vmem:[%s2] sm:$0x1]
        %v1052 = vlaneseq
        %v1053 = vshrl.u32 %v1052, 7
        %v1054 = vsub.s32 0, %v1053
        %v1055 = vrot.slane %v1050, %v1054
        %v1057 = vmul.f32 %v924, %v1055
        %v1058 = vmul.f32 %v927, %v1055
        %v1059 = vmul.f32 %v932, %v1055
        %v1060 = vmul.f32 %v935, %v1055
        %v1061 = vmul.f32 %v940, %v1055
        %v1062 = vmul.f32 %v943, %v1055
        %v1063 = vmul.f32 %v948, %v1055
        %v1064 = vmul.f32 %v951, %v1055
        %v1065 = vmul.f32 %v956, %v1055
        %v1066 = vmul.f32 %v959, %v1055
        %v1067 = vmul.f32 %v964, %v1055
        %v1068 = vmul.f32 %v967, %v1055
        %v1069 = vmul.f32 %v972, %v1055
        %v1070 = vmul.f32 %v975, %v1055
        %v1071 = vmul.f32 %v980, %v1055
        %v1072 = vmul.f32 %v983, %v1055
        %v1073 = vmul.f32 %v988, %v1055
        %v1074 = vmul.f32 %v991, %v1055
        %v1075 = vmul.f32 %v996, %v1055
        %v1076 = vmul.f32 %v999, %v1055
        %v1077 = vmul.f32 %v1004, %v1055
        %v1078 = vmul.f32 %v1007, %v1055
        %v1079 = vmul.f32 %v1012, %v1055
        %v1080 = vmul.f32 %v1015, %v1055
        %v1081 = vmul.f32 %v1020, %v1055
        %v1082 = vmul.f32 %v1023, %v1055
        %v1083 = vmul.f32 %v1028, %v1055
        %v1084 = vmul.f32 %v1031, %v1055
        %v1085 = vmul.f32 %v1036, %v1055
        %v1086 = vmul.f32 %v1039, %v1055
        %v1087 = vmul.f32 %v1044, %v1055
        %v1088 = vmul.f32 %v1047, %v1055
        %v1089 = vld [vmem:[%s3] sm:$0x1]
        %v1091 = vlaneseq
        %v1092 = vshrl.u32 %v1091, 7
        %v1093 = vsub.s32 0, %v1092
        %v1094 = vrot.slane %v1089, %v1093
        %v1096 = vadd.f32 %v1057, %v1094
        %v1097 = vadd.f32 %v1058, %v1094
        %v1098 = vadd.f32 %v1059, %v1094
        %v1099 = vadd.f32 %v1060, %v1094
        %v1100 = vadd.f32 %v1061, %v1094
        %v1101 = vadd.f32 %v1062, %v1094
        %v1102 = vadd.f32 %v1063, %v1094
        %v1103 = vadd.f32 %v1064, %v1094
        %v1104 = vadd.f32 %v1065, %v1094
        %v1105 = vadd.f32 %v1066, %v1094
        %v1106 = vadd.f32 %v1067, %v1094
        %v1107 = vadd.f32 %v1068, %v1094
        %v1108 = vadd.f32 %v1069, %v1094
        %v1109 = vadd.f32 %v1070, %v1094
        %v1110 = vadd.f32 %v1071, %v1094
        %v1111 = vadd.f32 %v1072, %v1094
        %v1112 = vadd.f32 %v1073, %v1094
        %v1113 = vadd.f32 %v1074, %v1094
        %v1114 = vadd.f32 %v1075, %v1094
        %v1115 = vadd.f32 %v1076, %v1094
        %v1116 = vadd.f32 %v1077, %v1094
        %v1117 = vadd.f32 %v1078, %v1094
        %v1118 = vadd.f32 %v1079, %v1094
        %v1119 = vadd.f32 %v1080, %v1094
        %v1120 = vadd.f32 %v1081, %v1094
        %v1121 = vadd.f32 %v1082, %v1094
        %v1122 = vadd.f32 %v1083, %v1094
        %v1123 = vadd.f32 %v1084, %v1094
        %v1124 = vadd.f32 %v1085, %v1094
        %v1125 = vadd.f32 %v1086, %v1094
        %v1126 = vadd.f32 %v1087, %v1094
        %v1127 = vadd.f32 %v1088, %v1094
        %v1128 = vmax.f32 %v1096, 0.0
        %v1129 = vmax.f32 %v1097, 0.0
        %v1130 = vmax.f32 %v1098, 0.0
        %v1131 = vmax.f32 %v1099, 0.0
        %v1132 = vmax.f32 %v1100, 0.0
        %v1133 = vmax.f32 %v1101, 0.0
        %v1134 = vmax.f32 %v1102, 0.0
        %v1135 = vmax.f32 %v1103, 0.0
        %v1136 = vmax.f32 %v1104, 0.0
        %v1137 = vmax.f32 %v1105, 0.0
        %v1138 = vmax.f32 %v1106, 0.0
        %v1139 = vmax.f32 %v1107, 0.0
        %v1140 = vmax.f32 %v1108, 0.0
        %v1141 = vmax.f32 %v1109, 0.0
        %v1142 = vmax.f32 %v1110, 0.0
        %v1143 = vmax.f32 %v1111, 0.0
        %v1144 = vmax.f32 %v1112, 0.0
        %v1145 = vmax.f32 %v1113, 0.0
        %v1146 = vmax.f32 %v1114, 0.0
        %v1147 = vmax.f32 %v1115, 0.0
        %v1148 = vmax.f32 %v1116, 0.0
        %v1149 = vmax.f32 %v1117, 0.0
        %v1150 = vmax.f32 %v1118, 0.0
        %v1151 = vmax.f32 %v1119, 0.0
        %v1152 = vmax.f32 %v1120, 0.0
        %v1153 = vmax.f32 %v1121, 0.0
        %v1154 = vmax.f32 %v1122, 0.0
        %v1155 = vmax.f32 %v1123, 0.0
        %v1156 = vmax.f32 %v1124, 0.0
        %v1157 = vmax.f32 %v1125, 0.0
        %v1158 = vmax.f32 %v1126, 0.0
        %v1159 = vmax.f32 %v1127, 0.0
        %1160 = vst.msk [vmem:[%s217] sm:$0xff] %vm679, %v1128
        %1161 = vst.msk [vmem:[%s217 + $0x8] sm:$0xff] %vm679, %v1129
        %1162 = vst.msk [vmem:[%s217 + $0x10] sm:$0xff] %vm679, %v1130
        %1163 = vst.msk [vmem:[%s217 + $0x18] sm:$0xff] %vm679, %v1131
        %1164 = vst.msk [vmem:[%s217 + $0x20] sm:$0xff] %vm679, %v1132
        %1165 = vst.msk [vmem:[%s217 + $0x28] sm:$0xff] %vm679, %v1133
        %1166 = vst.msk [vmem:[%s217 + $0x30] sm:$0xff] %vm679, %v1134
        %1167 = vst.msk [vmem:[%s217 + $0x38] sm:$0xff] %vm679, %v1135
        %1168 = vst.msk [vmem:[%s217 + $0x40] sm:$0xff] %vm679, %v1136
        %1169 = vst.msk [vmem:[%s217 + $0x48] sm:$0xff] %vm679, %v1137
        %1170 = vst.msk [vmem:[%s217 + $0x50] sm:$0xff] %vm679, %v1138
        %1171 = vst.msk [vmem:[%s217 + $0x58] sm:$0xff] %vm679, %v1139
        %1172 = vst.msk [vmem:[%s217 + $0x60] sm:$0xff] %vm679, %v1140
        %1173 = vst.msk [vmem:[%s217 + $0x68] sm:$0xff] %vm679, %v1141
        %1174 = vst.msk [vmem:[%s217 + $0x70] sm:$0xff] %vm679, %v1142
        %1175 = vst.msk [vmem:[%s217 + $0x78] sm:$0xff] %vm679, %v1143
        %1176 = vst.msk [vmem:[%s217 + $0x80] sm:$0xff] %vm679, %v1144
        %1177 = vst.msk [vmem:[%s217 + $0x88] sm:$0xff] %vm679, %v1145
        %1178 = vst.msk [vmem:[%s217 + $0x90] sm:$0xff] %vm679, %v1146
        %1179 = vst.msk [vmem:[%s217 + $0x98] sm:$0xff] %vm679, %v1147
        %1180 = vst.msk [vmem:[%s217 + $0xa0] sm:$0xff] %vm679, %v1148
        %1181 = vst.msk [vmem:[%s217 + $0xa8] sm:$0xff] %vm679, %v1149
        %1182 = vst.msk [vmem:[%s217 + $0xb0] sm:$0xff] %vm679, %v1150
        %1183 = vst.msk [vmem:[%s217 + $0xb8] sm:$0xff] %vm679, %v1151
        %1184 = vst.msk [vmem:[%s217 + $0xc0] sm:$0xff] %vm679, %v1152
        %1185 = vst.msk [vmem:[%s217 + $0xc8] sm:$0xff] %vm679, %v1153
        %1186 = vst.msk [vmem:[%s217 + $0xd0] sm:$0xff] %vm679, %v1154
        %1187 = vst.msk [vmem:[%s217 + $0xd8] sm:$0xff] %vm679, %v1155
        %1188 = vst.msk [vmem:[%s217 + $0xe0] sm:$0xff] %vm679, %v1156
        %1189 = vst.msk [vmem:[%s217 + $0xe8] sm:$0xff] %vm679, %v1157
        %1190 = vst.msk [vmem:[%s217 + $0xf0] sm:$0xff] %vm679, %v1158
        %1191 = vst.msk [vmem:[%s217 + $0xf8] sm:$0xff] %vm679, %v1159
        %s1192 = sand.u32 %s131, 1
        %s1193 = scalar_lea.sflag [#allocation3], %s1192
        %s1194 = sand.u32 %s131, 1
        %s1195 = smul.addr %s1194, 256
        %s1196 = scalar_lea.vmem [#allocation2], %s1195
        // Predicated region
        $region37: #{double_conv_encoder_forward.3} parent=35 // pred_check
          %p1197 = pneg %p141
        $region38: #{double_conv_encoder_forward.3} parent=35 // pred_check_branch
          %1199 = sbr.rel (%p1197) target = $region40
        $region39: #{double_conv_encoder_forward.3} parent=35 // pred_region
          %s1200 = smul.u32 32, %s23
          %s1202 = ssub.s32 4096, 4096
          %1203 = vsyncadd %s1193, %s1202
          %s1204 = smul.addr %s22, 32
          %s1205 = sadd.s32 %s1200, %s1204
          %s1206 = smul.addr %s1205, 128
          %s1207 = scalar_lea.hbm %s4, %s1206
          %s1208 = sshll.u32 %s1196, 4
          %s1209 = int_to_ptr.vmem [resolvable:$true] %s1208
          %1214 = dma.vmem_to_hbm [thread:$0]  %s1209, 4096, %s1207, %s1193, 128, 128, 8
        $region40: #{double_conv_encoder_forward.3} parent=35 // pred_fallthru
          _
      $region36: #{double_conv_encoder_forward.3} parent=5 // pred_fallthru
        _
      %p1215 = scmp.le.s32.totalorder 2, %s13
      // Predicated region
      $region41: #{double_conv_encoder_forward.3} parent=5 // pred_check
        %p1216 = pneg %p1215
      $region42: #{double_conv_encoder_forward.3} parent=5 // pred_check_branch
        %1218 = sbr.rel (%p1216) target = $region44
      $region43: #{double_conv_encoder_forward.3} parent=5 // pred_region
        %s1219 = ssub.s32 %s13, 2
        // Predicated region
        $region45: #{double_conv_encoder_forward.3} parent=43 // pred_check
          %p1220 = pneg %p147
        $region46: #{double_conv_encoder_forward.3} parent=43 // pred_check_branch
          %1222 = sbr.rel (%p1220) target = $region48
        $region47: #{double_conv_encoder_forward.3} parent=43 // pred_region
          %s1223 = sand.u32 %s132, 1
          %s1224 = scalar_lea.sflag [#allocation3], %s1223
          %s1225 = sand.u32 %s132, 1
          %s1226 = smul.addr %s1225, 256
          %s1227 = scalar_lea.vmem [#allocation2], %s1226
          %1228 = dma.done %s1224, 4096
        $region48: #{double_conv_encoder_forward.3} parent=43 // pred_fallthru
          _
      $region44: #{double_conv_encoder_forward.3} parent=5 // pred_fallthru
        _
    $region6: #{double_conv_encoder_forward.3} parent=1 // loop_footer
      %s17 = sadd.s32 1, %s13
    $region7: #{double_conv_encoder_forward.3} parent=1 // loop_footer_branch
      %12 = sbr.rel target = $region3
    $region8: #{double_conv_encoder_forward.3} parent=1 // loop_exit
      _
    %1229 = vsyncpa [#allocation3], 1
    %s1230 = scalar_lea.sflag [#allocation3], 1
    %1231 = vsyncpa %s1230, 1

</llo_original>
